<compile_context>
chip_gen: v7x
topology: tpu7x:2x2x1
jax: 0.10.0
libtpu: 0.0.40
codegen_flags: <defaults>
</compile_context>

<pallas_src>
import functools

import jax
import jax.numpy as jnp
from jax import lax
from jax.experimental import pallas as pl
from jax.experimental.pallas import tpu as pltpu


# ---------------------------------------------------------------------------
# In-kernel helpers
# ---------------------------------------------------------------------------
def _border_mask(row, col, dyo, dxo, H, W):
    """(1, H*W) validity mask for a tap shifted by (dyo, dxo); None if all valid."""
    m = None

    def _and(a, b):
        return b if a is None else (a & b)

    if dyo < 0:
        m = _and(m, row >= -dyo)
    elif dyo > 0:
        m = _and(m, row < H - dyo)
    if dxo < 0:
        m = _and(m, col >= -dxo)
    elif dxo > 0:
        m = _and(m, col < W - dxo)
    return m


def _shifted_taps(y, row, col, ksize, pad, H, W, fill):
    """K*K flat-shifted, border-masked copies of y (C, H*W), tap-major order.

    tap (dy, dx) value at flat position p = h*W + w is
        y[:, (h + dy - pad) * W + (w + dx - pad)]   (fill if out of bounds)
    implemented as a lane rotation (XLU) + a masked select (VPU).
    """
    HW = H * W
    taps = []
    for dy in range(ksize):
        for dx in range(ksize):
            dyo, dxo = dy - pad, dx - pad
            s = dyo * W + dxo
            t = y if s == 0 else pltpu.roll(y, shift=(-s) % HW, axis=1)
            m = _border_mask(row, col, dyo, dxo, H, W)
            if m is not None:
                t = jnp.where(m, t, fill)
            taps.append(t)
    return taps


# ---------------------------------------------------------------------------
# Fused Pallas kernel: one grid step == one full image
# ---------------------------------------------------------------------------
def _inception_kernel(x_ref, rc_ref, w123_ref, b123_ref, w3_ref, b3_ref,
                      w5_ref, b5_ref, w4_ref, b4_ref, o_ref, *,
                      H, W, Cin, C1, C2a, C2b, C3a, C3b, C4):
    """x_ref    : (1, Cin, H*W) f32   one input image, lane-dense
       rc_ref   : (2, H*W)     int32  [row index; col index] of each flat position
       w123_ref : (C1+C2a+C3a, Cin)      bf16  fused 1x1 weights (branches 1, 2a, 3a)
       w3_ref   : (C2b, 9*C2a)           bf16  K-stacked 3x3 weights
       w5_ref   : (C3b, 25*C3a)          bf16  K-stacked 5x5 weights
       w4_ref   : (C4, Cin)              bf16  post-pool 1x1 weights
       b*_ref   : (Cout, 1)              f32   biases
       o_ref    : (1, Ctot, H*W)         f32   concatenated NCHW output (flattened)
    """
    HW = H * W
    C123 = C1 + C2a + C3a
    row = rc_ref[0:1, :]
    col = rc_ref[1:2, :]

    x2d = x_ref[0]                                       # (Cin, HW) f32
    x_bf = x2d.astype(jnp.bfloat16)

    # ---- fused 1x1 convs of branches 1 / 2-reduce / 3-reduce: one MXU op ------
    y123 = jnp.dot(w123_ref[...], x_bf, preferred_element_type=jnp.float32)
    y123 = jnp.maximum(y123 + b123_ref[...], 0.0)        # (C123, HW) f32

    # ---- branch 1: 1x1 -> direct store at channel offset 0 ---------------------
    o_ref[0, 0:C1, :] = y123[0:C1]

    # ---- branch 2: 1x1 -> 3x3 (pad 1) as ONE K-stacked matmul ------------------
    y2a = y123[C1:C1 + C2a]                              # (C2a, HW) f32
    taps3 = _shifted_taps(y2a, row, col, 3, 1, H, W, 0.0)
    stacked3 = jnp.concatenate(taps3, axis=0).astype(jnp.bfloat16)   # (9*C2a, HW)
    y2 = jnp.dot(w3_ref[...], stacked3, preferred_element_type=jnp.float32)
    o_ref[0, C1:C1 + C2b, :] = jnp.maximum(y2 + b3_ref[...], 0.0)

    # ---- branch 3: 1x1 -> 5x5 (pad 2) as ONE K-stacked matmul ------------------
    y3a = y123[C1 + C2a:C123]                            # (C3a, HW) f32
    taps5 = _shifted_taps(y3a, row, col, 5, 2, H, W, 0.0)
    stacked5 = jnp.concatenate(taps5, axis=0).astype(jnp.bfloat16)   # (25*C3a, HW)
    y3 = jnp.dot(w5_ref[...], stacked5, preferred_element_type=jnp.float32)
    o_ref[0, C1 + C2b:C1 + C2b + C3b, :] = jnp.maximum(y3 + b5_ref[...], 0.0)

    # ---- branch 4: maxpool 3x3 (s=1, p=1) -> 1x1 -------------------------------
    ptaps = _shifted_taps(x2d, row, col, 3, 1, H, W, -jnp.inf)
    pooled = ptaps[0]
    for t in ptaps[1:]:
        pooled = jnp.maximum(pooled, t)                  # center tap keeps it finite
    y4 = jnp.dot(w4_ref[...], pooled.astype(jnp.bfloat16),
                 preferred_element_type=jnp.float32)
    off4 = C1 + C2b + C3b
    o_ref[0, off4:off4 + C4, :] = jnp.maximum(y4 + b4_ref[...], 0.0)


# ---------------------------------------------------------------------------
# Wrapper: weight re-layout + single pallas_call (no pads, no transposes of x)
# ---------------------------------------------------------------------------
def inceptionv1_forward(x_nchw, params):
    N, Cin, H, W = x_nchw.shape
    HW = H * W
    C1 = params["b1_w"].shape[0]
    C2a, C2b = params["b2a_w"].shape[0], params["b2b_w"].shape[0]
    C3a, C3b = params["b3a_w"].shape[0], params["b3b_w"].shape[0]
    C4 = params["b4_w"].shape[0]
    C123 = C1 + C2a + C3a
    Ctot = C1 + C2b + C3b + C4

    # fuse the three input-facing 1x1 convs into one (C123, Cin) matmul
    w123 = jnp.concatenate([params["b1_w"].reshape(C1, Cin),
                            params["b2a_w"].reshape(C2a, Cin),
                            params["b3a_w"].reshape(C3a, Cin)],
                           axis=0).astype(jnp.bfloat16)
    b123 = jnp.concatenate([params["b1_b"], params["b2a_b"], params["b3a_b"]]
                           ).reshape(C123, 1).astype(jnp.float32)
    # K-stacked spatial-conv weights: OIHW -> (O, KH, KW, I) -> (O, K*K*I)
    # so that stacked row (dy*K+dx)*Cin_branch + i matches the in-kernel tap order.
    w3s = jnp.transpose(params["b2b_w"], (0, 2, 3, 1)).reshape(C2b, 9 * C2a)
    w3s = w3s.astype(jnp.bfloat16)
    b3 = params["b2b_b"].reshape(C2b, 1).astype(jnp.float32)
    w5s = jnp.transpose(params["b3b_w"], (0, 2, 3, 1)).reshape(C3b, 25 * C3a)
    w5s = w5s.astype(jnp.bfloat16)
    b5 = params["b3b_b"].reshape(C3b, 1).astype(jnp.float32)
    w4 = params["b4_w"].reshape(C4, Cin).astype(jnp.bfloat16)
    b4 = params["b4_b"].reshape(C4, 1).astype(jnp.float32)

    # lane-dense flattened input (free reshape) + precomputed row/col index vectors
    x_flat = x_nchw.reshape(N, Cin, HW)
    pos = jnp.arange(HW, dtype=jnp.int32)
    rowcol = jnp.stack([pos // W, pos % W], axis=0).astype(jnp.int32)   # (2, HW)

    kern = functools.partial(_inception_kernel, H=H, W=W, Cin=Cin,
                             C1=C1, C2a=C2a, C2b=C2b, C3a=C3a, C3b=C3b, C4=C4)

    out_flat = pl.pallas_call(
        kern,
        out_shape=jax.ShapeDtypeStruct((N, Ctot, HW), jnp.float32),
        grid=(N,),
        in_specs=[
            pl.BlockSpec((1, Cin, HW), lambda n: (n, 0, 0)),
            pl.BlockSpec((2, HW), lambda n: (0, 0)),
            pl.BlockSpec((C123, Cin), lambda n: (0, 0)),
            pl.BlockSpec((C123, 1), lambda n: (0, 0)),
            pl.BlockSpec((C2b, 9 * C2a), lambda n: (0, 0)),
            pl.BlockSpec((C2b, 1), lambda n: (0, 0)),
            pl.BlockSpec((C3b, 25 * C3a), lambda n: (0, 0)),
            pl.BlockSpec((C3b, 1), lambda n: (0, 0)),
            pl.BlockSpec((C4, Cin), lambda n: (0, 0)),
            pl.BlockSpec((C4, 1), lambda n: (0, 0)),
        ],
        out_specs=pl.BlockSpec((1, Ctot, HW), lambda n: (n, 0, 0)),
        compiler_params=pltpu.CompilerParams(
            dimension_semantics=("parallel",)),
    )(x_flat, rowcol, w123, b123, w3s, b3, w5s, b5, w4, b4)

    # free (bitcast) reshape back to NCHW: (N, Ctot, H*W) -> (N, Ctot, H, W)
    return out_flat.reshape(N, Ctot, H, W)


# ---------------------------------------------------------------------------
# Pure-JAX reference for correctness checking
# ---------------------------------------------------------------------------
def _ref_conv_relu(x_nchw, w, b, padding):
    y = lax.conv_general_dilated(
        x_nchw, w, window_strides=(1, 1),
        padding=((padding, padding), (padding, padding)),
        dimension_numbers=("NCHW", "OIHW", "NCHW"))
    return jnp.maximum(y + b[None, :, None, None], 0.0)


def inceptionv1_reference(x_nchw, p):
    x1 = _ref_conv_relu(x_nchw, p["b1_w"], p["b1_b"], 0)
    x2 = _ref_conv_relu(x_nchw, p["b2a_w"], p["b2a_b"], 0)
    x2 = _ref_conv_relu(x2, p["b2b_w"], p["b2b_b"], 1)
    x3 = _ref_conv_relu(x_nchw, p["b3a_w"], p["b3a_b"], 0)
    x3 = _ref_conv_relu(x3, p["b3b_w"], p["b3b_b"], 2)
    x4 = lax.reduce_window(x_nchw, -jnp.inf, lax.max,
                           window_dimensions=(1, 1, 3, 3),
                           window_strides=(1, 1, 1, 1),
                           padding=((0, 0), (0, 0), (1, 1), (1, 1)))
    x4 = _ref_conv_relu(x4, p["b4_w"], p["b4_b"], 0)
    return jnp.concatenate([x1, x2, x3, x4], axis=1)


# ---------------------------------------------------------------------------
def make_params(key, input_dim, hidden_1_1, hidden_2_1, hidden_2_3,
                hidden_3_1, output_3_5, output_4_1):
    def conv_init(k, cout, cin, ksz):
        kw, kb = jax.random.split(k)
        w = jax.random.normal(kw, (cout, cin, ksz, ksz), jnp.float32) * 0.1
        b = jax.random.normal(kb, (cout,), jnp.float32) * 0.1
        return w, b

    ks = jax.random.split(key, 6)
    p = {}
    p["b1_w"], p["b1_b"] = conv_init(ks[0], hidden_1_1, input_dim, 1)
    p["b2a_w"], p["b2a_b"] = conv_init(ks[1], hidden_2_1, input_dim, 1)
    p["b2b_w"], p["b2b_b"] = conv_init(ks[2], hidden_2_3, hidden_2_1, 3)
    p["b3a_w"], p["b3a_b"] = conv_init(ks[3], hidden_3_1, input_dim, 1)
    p["b3b_w"], p["b3b_b"] = conv_init(ks[4], output_3_5, hidden_3_1, 5)
    p["b4_w"], p["b4_b"] = conv_init(ks[5], output_4_1, input_dim, 1)
    return p


if __name__ == "__main__":
    # Small shapes consistent with the module's forward (NCHW input).
    N, input_dim, H, W = 2, 4, 16, 16
    hidden_1_1, hidden_2_1, hidden_2_3 = 8, 4, 8
    hidden_3_1, output_3_5, output_4_1 = 4, 8, 8

    key = jax.random.PRNGKey(0)
    kx, kp = jax.random.split(key)
    x = jax.random.normal(kx, (N, input_dim, H, W), jnp.float32)
    params = make_params(kp, input_dim, hidden_1_1, hidden_2_1, hidden_2_3,
                         hidden_3_1, output_3_5, output_4_1)

    out = jax.jit(inceptionv1_forward)(x, params)
    out = jax.block_until_ready(out)

    expected_c = hidden_1_1 + hidden_2_3 + output_3_5 + output_4_1
    assert out.shape == (N, expected_c, H, W), out.shape

    # bf16 MXU operands with f32 accumulation -> loosened tolerance vs f32 reference
    ref = inceptionv1_reference(x, params)
    max_err = float(jnp.max(jnp.abs(out - ref)))
    assert jnp.allclose(out, ref, rtol=2e-2, atol=2e-2), max_err

    print("KERNEL_OK")
</pallas_src>

<mosaic_0001>
module attributes {stable_mosaic.version = 11 : i64} {
  func.func @_inception_kernel(%arg0: i32, %arg1: memref<1x4x256xf32, #tpu.memory_space<vmem>>, %arg2: memref<2x256xi32, #tpu.memory_space<vmem>>, %arg3: memref<16x4xbf16, #tpu.memory_space<vmem>>, %arg4: memref<16x1xf32, #tpu.memory_space<vmem>>, %arg5: memref<8x36xbf16, #tpu.memory_space<vmem>>, %arg6: memref<8x1xf32, #tpu.memory_space<vmem>>, %arg7: memref<8x100xbf16, #tpu.memory_space<vmem>>, %arg8: memref<8x1xf32, #tpu.memory_space<vmem>>, %arg9: memref<8x4xbf16, #tpu.memory_space<vmem>>, %arg10: memref<8x1xf32, #tpu.memory_space<vmem>>, %arg11: memref<1x32x256xf32, #tpu.memory_space<vmem>>) attributes {dimension_semantics = [#tpu.dimension_semantics<parallel>], iteration_bounds = array<i64: 2>, scalar_prefetch = 0 : i64, scratch_operands = 0 : i64, tpu.core_type = #tpu.core_type<tc>, window_params = [{transform_indices = @transform_0, window_bounds = array<i64: 1, 4, 256>}, {pipeline_mode = #tpu.pipeline_mode<synchronous>, transform_indices = @transform_1, window_bounds = array<i64: 2, 256>}, {pipeline_mode = #tpu.pipeline_mode<synchronous>, transform_indices = @transform_2, window_bounds = array<i64: 16, 4>}, {pipeline_mode = #tpu.pipeline_mode<synchronous>, transform_indices = @transform_3, window_bounds = array<i64: 16, 1>}, {pipeline_mode = #tpu.pipeline_mode<synchronous>, transform_indices = @transform_4, window_bounds = array<i64: 8, 36>}, {pipeline_mode = #tpu.pipeline_mode<synchronous>, transform_indices = @transform_5, window_bounds = array<i64: 8, 1>}, {pipeline_mode = #tpu.pipeline_mode<synchronous>, transform_indices = @transform_6, window_bounds = array<i64: 8, 100>}, {pipeline_mode = #tpu.pipeline_mode<synchronous>, transform_indices = @transform_7, window_bounds = array<i64: 8, 1>}, {pipeline_mode = #tpu.pipeline_mode<synchronous>, transform_indices = @transform_8, window_bounds = array<i64: 8, 4>}, {pipeline_mode = #tpu.pipeline_mode<synchronous>, transform_indices = @transform_9, window_bounds = array<i64: 8, 1>}, {transform_indices = @transform_10, window_bounds = array<i64: 1, 32, 256>}]} {
    %c0 = arith.constant 0 : index
    %c0_0 = arith.constant 0 : index
    %0 = vector.load %arg2[%c0, %c0_0] : memref<2x256xi32, #tpu.memory_space<vmem>>, vector<1x256xi32>
    %c1 = arith.constant 1 : index
    %c0_1 = arith.constant 0 : index
    %1 = vector.load %arg2[%c1, %c0_1] : memref<2x256xi32, #tpu.memory_space<vmem>>, vector<1x256xi32>
    %c0_2 = arith.constant 0 : index
    %c0_3 = arith.constant 0 : index
    %c0_4 = arith.constant 0 : index
    %2 = vector.load %arg1[%c0_2, %c0_3, %c0_4] : memref<1x4x256xf32, #tpu.memory_space<vmem>>, vector<1x4x256xf32>
    %3 = vector.shape_cast %2 : vector<1x4x256xf32> to vector<4x256xf32>
    %4 = arith.truncf %3 : vector<4x256xf32> to vector<4x256xbf16>
    %c0_5 = arith.constant 0 : index
    %c0_6 = arith.constant 0 : index
    %5 = vector.load %arg3[%c0_5, %c0_6] : memref<16x4xbf16, #tpu.memory_space<vmem>>, vector<16x4xbf16>
    %cst = arith.constant dense<0.000000e+00> : vector<16x256xf32>
    %6 = tpu.matmul %5, %4, %cst {dimension_numbers = #tpu.dot_dimension_numbers<[1], [0], [0], [1], [0, 0, 1, 1], [], []>} : vector<16x4xbf16>, vector<4x256xbf16>, vector<16x256xf32> -> vector<16x256xf32>
    %c0_7 = arith.constant 0 : index
    %c0_8 = arith.constant 0 : index
    %7 = vector.load %arg4[%c0_7, %c0_8] : memref<16x1xf32, #tpu.memory_space<vmem>>, vector<16x1xf32>
    %8 = vector.broadcast %7 : vector<16x1xf32> to vector<16x256xf32>
    %9 = arith.addf %6, %8 : vector<16x256xf32>
    %cst_9 = arith.constant 0.000000e+00 : f32
    %10 = vector.broadcast %cst_9 : f32 to vector<16x256xf32>
    %11 = arith.maximumf %9, %10 : vector<16x256xf32>
    %12 = vector.extract_strided_slice %11 {offsets = [0, 0], sizes = [8, 256], strides = [1, 1]} : vector<16x256xf32> to vector<8x256xf32>
    %c0_10 = arith.constant 0 : index
    %c0_11 = arith.constant 0 : index
    %c0_12 = arith.constant 0 : index
    %13 = vector.load %arg11[%c0_10, %c0_11, %c0_12] : memref<1x32x256xf32, #tpu.memory_space<vmem>>, vector<1x8x256xf32>
    %14 = vector.shape_cast %13 : vector<1x8x256xf32> to vector<8x256xf32>
    %15 = vector.shape_cast %12 : vector<8x256xf32> to vector<1x8x256xf32>
    tpu.vector_store %arg11[%c0_10, %c0_11, %c0_12], %15 {strides = array<i32>} : memref<1x32x256xf32, #tpu.memory_space<vmem>>, vector<1x8x256xf32>,
    %16 = vector.extract_strided_slice %11 {offsets = [8, 0], sizes = [4, 256], strides = [1, 1]} : vector<16x256xf32> to vector<4x256xf32>
    %c17_i32 = arith.constant 17 : i32
    %17 = tpu.dynamic_rotate %16 by %c17_i32 dim 1 : vector<4x256xf32>, i32 -> vector<4x256xf32>
    %c1_i32 = arith.constant 1 : i32
    %18 = vector.broadcast %c1_i32 : i32 to vector<1x256xi32>
    %19 = arith.cmpi sge, %0, %18 : vector<1x256xi32>
    %c1_i32_13 = arith.constant 1 : i32
    %20 = vector.broadcast %c1_i32_13 : i32 to vector<1x256xi32>
    %21 = arith.cmpi sge, %1, %20 : vector<1x256xi32>
    %22 = arith.andi %19, %21 : vector<1x256xi1>
    %cst_14 = arith.constant 0.000000e+00 : f32
    %23 = vector.shape_cast %22 : vector<1x256xi1> to vector<1x256xi1>
    %24 = vector.broadcast %23 : vector<1x256xi1> to vector<4x256xi1>
    %25 = vector.broadcast %cst_14 : f32 to vector<4x256xf32>
    %26 = arith.select %24, %17, %25 : vector<4x256xi1>, vector<4x256xf32>
    %c16_i32 = arith.constant 16 : i32
    %27 = tpu.dynamic_rotate %16 by %c16_i32 dim 1 : vector<4x256xf32>, i32 -> vector<4x256xf32>
    %c1_i32_15 = arith.constant 1 : i32
    %28 = vector.broadcast %c1_i32_15 : i32 to vector<1x256xi32>
    %29 = arith.cmpi sge, %0, %28 : vector<1x256xi32>
    %cst_16 = arith.constant 0.000000e+00 : f32
    %30 = vector.shape_cast %29 : vector<1x256xi1> to vector<1x256xi1>
    %31 = vector.broadcast %30 : vector<1x256xi1> to vector<4x256xi1>
    %32 = vector.broadcast %cst_16 : f32 to vector<4x256xf32>
    %33 = arith.select %31, %27, %32 : vector<4x256xi1>, vector<4x256xf32>
    %c15_i32 = arith.constant 15 : i32
    %34 = tpu.dynamic_rotate %16 by %c15_i32 dim 1 : vector<4x256xf32>, i32 -> vector<4x256xf32>
    %c1_i32_17 = arith.constant 1 : i32
    %35 = vector.broadcast %c1_i32_17 : i32 to vector<1x256xi32>
    %36 = arith.cmpi sge, %0, %35 : vector<1x256xi32>
    %c15_i32_18 = arith.constant 15 : i32
    %37 = vector.broadcast %c15_i32_18 : i32 to vector<1x256xi32>
    %38 = arith.cmpi slt, %1, %37 : vector<1x256xi32>
    %39 = arith.andi %36, %38 : vector<1x256xi1>
    %cst_19 = arith.constant 0.000000e+00 : f32
    %40 = vector.shape_cast %39 : vector<1x256xi1> to vector<1x256xi1>
    %41 = vector.broadcast %40 : vector<1x256xi1> to vector<4x256xi1>
    %42 = vector.broadcast %cst_19 : f32 to vector<4x256xf32>
    %43 = arith.select %41, %34, %42 : vector<4x256xi1>, vector<4x256xf32>
    %c1_i32_20 = arith.constant 1 : i32
    %44 = tpu.dynamic_rotate %16 by %c1_i32_20 dim 1 : vector<4x256xf32>, i32 -> vector<4x256xf32>
    %c1_i32_21 = arith.constant 1 : i32
    %45 = vector.broadcast %c1_i32_21 : i32 to vector<1x256xi32>
    %46 = arith.cmpi sge, %1, %45 : vector<1x256xi32>
    %cst_22 = arith.constant 0.000000e+00 : f32
    %47 = vector.shape_cast %46 : vector<1x256xi1> to vector<1x256xi1>
    %48 = vector.broadcast %47 : vector<1x256xi1> to vector<4x256xi1>
    %49 = vector.broadcast %cst_22 : f32 to vector<4x256xf32>
    %50 = arith.select %48, %44, %49 : vector<4x256xi1>, vector<4x256xf32>
    %c255_i32 = arith.constant 255 : i32
    %51 = tpu.dynamic_rotate %16 by %c255_i32 dim 1 : vector<4x256xf32>, i32 -> vector<4x256xf32>
    %c15_i32_23 = arith.constant 15 : i32
    %52 = vector.broadcast %c15_i32_23 : i32 to vector<1x256xi32>
    %53 = arith.cmpi slt, %1, %52 : vector<1x256xi32>
    %cst_24 = arith.constant 0.000000e+00 : f32
    %54 = vector.shape_cast %53 : vector<1x256xi1> to vector<1x256xi1>
    %55 = vector.broadcast %54 : vector<1x256xi1> to vector<4x256xi1>
    %56 = vector.broadcast %cst_24 : f32 to vector<4x256xf32>
    %57 = arith.select %55, %51, %56 : vector<4x256xi1>, vector<4x256xf32>
    %c241_i32 = arith.constant 241 : i32
    %58 = tpu.dynamic_rotate %16 by %c241_i32 dim 1 : vector<4x256xf32>, i32 -> vector<4x256xf32>
    %c15_i32_25 = arith.constant 15 : i32
    %59 = vector.broadcast %c15_i32_25 : i32 to vector<1x256xi32>
    %60 = arith.cmpi slt, %0, %59 : vector<1x256xi32>
    %c1_i32_26 = arith.constant 1 : i32
    %61 = vector.broadcast %c1_i32_26 : i32 to vector<1x256xi32>
    %62 = arith.cmpi sge, %1, %61 : vector<1x256xi32>
    %63 = arith.andi %60, %62 : vector<1x256xi1>
    %cst_27 = arith.constant 0.000000e+00 : f32
    %64 = vector.shape_cast %63 : vector<1x256xi1> to vector<1x256xi1>
    %65 = vector.broadcast %64 : vector<1x256xi1> to vector<4x256xi1>
    %66 = vector.broadcast %cst_27 : f32 to vector<4x256xf32>
    %67 = arith.select %65, %58, %66 : vector<4x256xi1>, vector<4x256xf32>
    %c240_i32 = arith.constant 240 : i32
    %68 = tpu.dynamic_rotate %16 by %c240_i32 dim 1 : vector<4x256xf32>, i32 -> vector<4x256xf32>
    %c15_i32_28 = arith.constant 15 : i32
    %69 = vector.broadcast %c15_i32_28 : i32 to vector<1x256xi32>
    %70 = arith.cmpi slt, %0, %69 : vector<1x256xi32>
    %cst_29 = arith.constant 0.000000e+00 : f32
    %71 = vector.shape_cast %70 : vector<1x256xi1> to vector<1x256xi1>
    %72 = vector.broadcast %71 : vector<1x256xi1> to vector<4x256xi1>
    %73 = vector.broadcast %cst_29 : f32 to vector<4x256xf32>
    %74 = arith.select %72, %68, %73 : vector<4x256xi1>, vector<4x256xf32>
    %c239_i32 = arith.constant 239 : i32
    %75 = tpu.dynamic_rotate %16 by %c239_i32 dim 1 : vector<4x256xf32>, i32 -> vector<4x256xf32>
    %c15_i32_30 = arith.constant 15 : i32
    %76 = vector.broadcast %c15_i32_30 : i32 to vector<1x256xi32>
    %77 = arith.cmpi slt, %0, %76 : vector<1x256xi32>
    %c15_i32_31 = arith.constant 15 : i32
    %78 = vector.broadcast %c15_i32_31 : i32 to vector<1x256xi32>
    %79 = arith.cmpi slt, %1, %78 : vector<1x256xi32>
    %80 = arith.andi %77, %79 : vector<1x256xi1>
    %cst_32 = arith.constant 0.000000e+00 : f32
    %81 = vector.shape_cast %80 : vector<1x256xi1> to vector<1x256xi1>
    %82 = vector.broadcast %81 : vector<1x256xi1> to vector<4x256xi1>
    %83 = vector.broadcast %cst_32 : f32 to vector<4x256xf32>
    %84 = arith.select %82, %75, %83 : vector<4x256xi1>, vector<4x256xf32>
    %85 = tpu.concatenate %26, %33, %43, %50, %16, %57, %67, %74, %84 in 0 : vector<4x256xf32>, vector<4x256xf32>, vector<4x256xf32>, vector<4x256xf32>, vector<4x256xf32>, vector<4x256xf32>, vector<4x256xf32>, vector<4x256xf32>, vector<4x256xf32> -> vector<36x256xf32>
    %86 = arith.truncf %85 : vector<36x256xf32> to vector<36x256xbf16>
    %c0_33 = arith.constant 0 : index
    %c0_34 = arith.constant 0 : index
    %87 = vector.load %arg5[%c0_33, %c0_34] : memref<8x36xbf16, #tpu.memory_space<vmem>>, vector<8x36xbf16>
    %cst_35 = arith.constant dense<0.000000e+00> : vector<8x256xf32>
    %88 = tpu.matmul %87, %86, %cst_35 {dimension_numbers = #tpu.dot_dimension_numbers<[1], [0], [0], [1], [0, 0, 1, 1], [], []>} : vector<8x36xbf16>, vector<36x256xbf16>, vector<8x256xf32> -> vector<8x256xf32>
    %c0_36 = arith.constant 0 : index
    %c0_37 = arith.constant 0 : index
    %89 = vector.load %arg6[%c0_36, %c0_37] : memref<8x1xf32, #tpu.memory_space<vmem>>, vector<8x1xf32>
    %90 = vector.broadcast %89 : vector<8x1xf32> to vector<8x256xf32>
    %91 = arith.addf %88, %90 : vector<8x256xf32>
    %cst_38 = arith.constant 0.000000e+00 : f32
    %92 = vector.broadcast %cst_38 : f32 to vector<8x256xf32>
    %93 = arith.maximumf %91, %92 : vector<8x256xf32>
    %c0_39 = arith.constant 0 : index
    %c8 = arith.constant 8 : index
    %c0_40 = arith.constant 0 : index
    %94 = vector.load %arg11[%c0_39, %c8, %c0_40] : memref<1x32x256xf32, #tpu.memory_space<vmem>>, vector<1x8x256xf32>
    %95 = vector.shape_cast %94 : vector<1x8x256xf32> to vector<8x256xf32>
    %96 = vector.shape_cast %93 : vector<8x256xf32> to vector<1x8x256xf32>
    tpu.vector_store %arg11[%c0_39, %c8, %c0_40], %96 {strides = array<i32>} : memref<1x32x256xf32, #tpu.memory_space<vmem>>, vector<1x8x256xf32>,
    %97 = vector.extract_strided_slice %11 {offsets = [12, 0], sizes = [4, 256], strides = [1, 1]} : vector<16x256xf32> to vector<4x256xf32>
    %c34_i32 = arith.constant 34 : i32
    %98 = tpu.dynamic_rotate %97 by %c34_i32 dim 1 : vector<4x256xf32>, i32 -> vector<4x256xf32>
    %c2_i32 = arith.constant 2 : i32
    %99 = vector.broadcast %c2_i32 : i32 to vector<1x256xi32>
    %100 = arith.cmpi sge, %0, %99 : vector<1x256xi32>
    %c2_i32_41 = arith.constant 2 : i32
    %101 = vector.broadcast %c2_i32_41 : i32 to vector<1x256xi32>
    %102 = arith.cmpi sge, %1, %101 : vector<1x256xi32>
    %103 = arith.andi %100, %102 : vector<1x256xi1>
    %cst_42 = arith.constant 0.000000e+00 : f32
    %104 = vector.shape_cast %103 : vector<1x256xi1> to vector<1x256xi1>
    %105 = vector.broadcast %104 : vector<1x256xi1> to vector<4x256xi1>
    %106 = vector.broadcast %cst_42 : f32 to vector<4x256xf32>
    %107 = arith.select %105, %98, %106 : vector<4x256xi1>, vector<4x256xf32>
    %c33_i32 = arith.constant 33 : i32
    %108 = tpu.dynamic_rotate %97 by %c33_i32 dim 1 : vector<4x256xf32>, i32 -> vector<4x256xf32>
    %c2_i32_43 = arith.constant 2 : i32
    %109 = vector.broadcast %c2_i32_43 : i32 to vector<1x256xi32>
    %110 = arith.cmpi sge, %0, %109 : vector<1x256xi32>
    %c1_i32_44 = arith.constant 1 : i32
    %111 = vector.broadcast %c1_i32_44 : i32 to vector<1x256xi32>
    %112 = arith.cmpi sge, %1, %111 : vector<1x256xi32>
    %113 = arith.andi %110, %112 : vector<1x256xi1>
    %cst_45 = arith.constant 0.000000e+00 : f32
    %114 = vector.shape_cast %113 : vector<1x256xi1> to vector<1x256xi1>
    %115 = vector.broadcast %114 : vector<1x256xi1> to vector<4x256xi1>
    %116 = vector.broadcast %cst_45 : f32 to vector<4x256xf32>
    %117 = arith.select %115, %108, %116 : vector<4x256xi1>, vector<4x256xf32>
    %c32_i32 = arith.constant 32 : i32
    %118 = tpu.dynamic_rotate %97 by %c32_i32 dim 1 : vector<4x256xf32>, i32 -> vector<4x256xf32>
    %c2_i32_46 = arith.constant 2 : i32
    %119 = vector.broadcast %c2_i32_46 : i32 to vector<1x256xi32>
    %120 = arith.cmpi sge, %0, %119 : vector<1x256xi32>
    %cst_47 = arith.constant 0.000000e+00 : f32
    %121 = vector.shape_cast %120 : vector<1x256xi1> to vector<1x256xi1>
    %122 = vector.broadcast %121 : vector<1x256xi1> to vector<4x256xi1>
    %123 = vector.broadcast %cst_47 : f32 to vector<4x256xf32>
    %124 = arith.select %122, %118, %123 : vector<4x256xi1>, vector<4x256xf32>
    %c31_i32 = arith.constant 31 : i32
    %125 = tpu.dynamic_rotate %97 by %c31_i32 dim 1 : vector<4x256xf32>, i32 -> vector<4x256xf32>
    %c2_i32_48 = arith.constant 2 : i32
    %126 = vector.broadcast %c2_i32_48 : i32 to vector<1x256xi32>
    %127 = arith.cmpi sge, %0, %126 : vector<1x256xi32>
    %c15_i32_49 = arith.constant 15 : i32
    %128 = vector.broadcast %c15_i32_49 : i32 to vector<1x256xi32>
    %129 = arith.cmpi slt, %1, %128 : vector<1x256xi32>
    %130 = arith.andi %127, %129 : vector<1x256xi1>
    %cst_50 = arith.constant 0.000000e+00 : f32
    %131 = vector.shape_cast %130 : vector<1x256xi1> to vector<1x256xi1>
    %132 = vector.broadcast %131 : vector<1x256xi1> to vector<4x256xi1>
    %133 = vector.broadcast %cst_50 : f32 to vector<4x256xf32>
    %134 = arith.select %132, %125, %133 : vector<4x256xi1>, vector<4x256xf32>
    %c30_i32 = arith.constant 30 : i32
    %135 = tpu.dynamic_rotate %97 by %c30_i32 dim 1 : vector<4x256xf32>, i32 -> vector<4x256xf32>
    %c2_i32_51 = arith.constant 2 : i32
    %136 = vector.broadcast %c2_i32_51 : i32 to vector<1x256xi32>
    %137 = arith.cmpi sge, %0, %136 : vector<1x256xi32>
    %c14_i32 = arith.constant 14 : i32
    %138 = vector.broadcast %c14_i32 : i32 to vector<1x256xi32>
    %139 = arith.cmpi slt, %1, %138 : vector<1x256xi32>
    %140 = arith.andi %137, %139 : vector<1x256xi1>
    %cst_52 = arith.constant 0.000000e+00 : f32
    %141 = vector.shape_cast %140 : vector<1x256xi1> to vector<1x256xi1>
    %142 = vector.broadcast %141 : vector<1x256xi1> to vector<4x256xi1>
    %143 = vector.broadcast %cst_52 : f32 to vector<4x256xf32>
    %144 = arith.select %142, %135, %143 : vector<4x256xi1>, vector<4x256xf32>
    %c18_i32 = arith.constant 18 : i32
    %145 = tpu.dynamic_rotate %97 by %c18_i32 dim 1 : vector<4x256xf32>, i32 -> vector<4x256xf32>
    %c1_i32_53 = arith.constant 1 : i32
    %146 = vector.broadcast %c1_i32_53 : i32 to vector<1x256xi32>
    %147 = arith.cmpi sge, %0, %146 : vector<1x256xi32>
    %c2_i32_54 = arith.constant 2 : i32
    %148 = vector.broadcast %c2_i32_54 : i32 to vector<1x256xi32>
    %149 = arith.cmpi sge, %1, %148 : vector<1x256xi32>
    %150 = arith.andi %147, %149 : vector<1x256xi1>
    %cst_55 = arith.constant 0.000000e+00 : f32
    %151 = vector.shape_cast %150 : vector<1x256xi1> to vector<1x256xi1>
    %152 = vector.broadcast %151 : vector<1x256xi1> to vector<4x256xi1>
    %153 = vector.broadcast %cst_55 : f32 to vector<4x256xf32>
    %154 = arith.select %152, %145, %153 : vector<4x256xi1>, vector<4x256xf32>
    %c17_i32_56 = arith.constant 17 : i32
    %155 = tpu.dynamic_rotate %97 by %c17_i32_56 dim 1 : vector<4x256xf32>, i32 -> vector<4x256xf32>
    %c1_i32_57 = arith.constant 1 : i32
    %156 = vector.broadcast %c1_i32_57 : i32 to vector<1x256xi32>
    %157 = arith.cmpi sge, %0, %156 : vector<1x256xi32>
    %c1_i32_58 = arith.constant 1 : i32
    %158 = vector.broadcast %c1_i32_58 : i32 to vector<1x256xi32>
    %159 = arith.cmpi sge, %1, %158 : vector<1x256xi32>
    %160 = arith.andi %157, %159 : vector<1x256xi1>
    %cst_59 = arith.constant 0.000000e+00 : f32
    %161 = vector.shape_cast %160 : vector<1x256xi1> to vector<1x256xi1>
    %162 = vector.broadcast %161 : vector<1x256xi1> to vector<4x256xi1>
    %163 = vector.broadcast %cst_59 : f32 to vector<4x256xf32>
    %164 = arith.select %162, %155, %163 : vector<4x256xi1>, vector<4x256xf32>
    %c16_i32_60 = arith.constant 16 : i32
    %165 = tpu.dynamic_rotate %97 by %c16_i32_60 dim 1 : vector<4x256xf32>, i32 -> vector<4x256xf32>
    %c1_i32_61 = arith.constant 1 : i32
    %166 = vector.broadcast %c1_i32_61 : i32 to vector<1x256xi32>
    %167 = arith.cmpi sge, %0, %166 : vector<1x256xi32>
    %cst_62 = arith.constant 0.000000e+00 : f32
    %168 = vector.shape_cast %167 : vector<1x256xi1> to vector<1x256xi1>
    %169 = vector.broadcast %168 : vector<1x256xi1> to vector<4x256xi1>
    %170 = vector.broadcast %cst_62 : f32 to vector<4x256xf32>
    %171 = arith.select %169, %165, %170 : vector<4x256xi1>, vector<4x256xf32>
    %c15_i32_63 = arith.constant 15 : i32
    %172 = tpu.dynamic_rotate %97 by %c15_i32_63 dim 1 : vector<4x256xf32>, i32 -> vector<4x256xf32>
    %c1_i32_64 = arith.constant 1 : i32
    %173 = vector.broadcast %c1_i32_64 : i32 to vector<1x256xi32>
    %174 = arith.cmpi sge, %0, %173 : vector<1x256xi32>
    %c15_i32_65 = arith.constant 15 : i32
    %175 = vector.broadcast %c15_i32_65 : i32 to vector<1x256xi32>
    %176 = arith.cmpi slt, %1, %175 : vector<1x256xi32>
    %177 = arith.andi %174, %176 : vector<1x256xi1>
    %cst_66 = arith.constant 0.000000e+00 : f32
    %178 = vector.shape_cast %177 : vector<1x256xi1> to vector<1x256xi1>
    %179 = vector.broadcast %178 : vector<1x256xi1> to vector<4x256xi1>
    %180 = vector.broadcast %cst_66 : f32 to vector<4x256xf32>
    %181 = arith.select %179, %172, %180 : vector<4x256xi1>, vector<4x256xf32>
    %c14_i32_67 = arith.constant 14 : i32
    %182 = tpu.dynamic_rotate %97 by %c14_i32_67 dim 1 : vector<4x256xf32>, i32 -> vector<4x256xf32>
    %c1_i32_68 = arith.constant 1 : i32
    %183 = vector.broadcast %c1_i32_68 : i32 to vector<1x256xi32>
    %184 = arith.cmpi sge, %0, %183 : vector<1x256xi32>
    %c14_i32_69 = arith.constant 14 : i32
    %185 = vector.broadcast %c14_i32_69 : i32 to vector<1x256xi32>
    %186 = arith.cmpi slt, %1, %185 : vector<1x256xi32>
    %187 = arith.andi %184, %186 : vector<1x256xi1>
    %cst_70 = arith.constant 0.000000e+00 : f32
    %188 = vector.shape_cast %187 : vector<1x256xi1> to vector<1x256xi1>
    %189 = vector.broadcast %188 : vector<1x256xi1> to vector<4x256xi1>
    %190 = vector.broadcast %cst_70 : f32 to vector<4x256xf32>
    %191 = arith.select %189, %182, %190 : vector<4x256xi1>, vector<4x256xf32>
    %c2_i32_71 = arith.constant 2 : i32
    %192 = tpu.dynamic_rotate %97 by %c2_i32_71 dim 1 : vector<4x256xf32>, i32 -> vector<4x256xf32>
    %c2_i32_72 = arith.constant 2 : i32
    %193 = vector.broadcast %c2_i32_72 : i32 to vector<1x256xi32>
    %194 = arith.cmpi sge, %1, %193 : vector<1x256xi32>
    %cst_73 = arith.constant 0.000000e+00 : f32
    %195 = vector.shape_cast %194 : vector<1x256xi1> to vector<1x256xi1>
    %196 = vector.broadcast %195 : vector<1x256xi1> to vector<4x256xi1>
    %197 = vector.broadcast %cst_73 : f32 to vector<4x256xf32>
    %198 = arith.select %196, %192, %197 : vector<4x256xi1>, vector<4x256xf32>
    %c1_i32_74 = arith.constant 1 : i32
    %199 = tpu.dynamic_rotate %97 by %c1_i32_74 dim 1 : vector<4x256xf32>, i32 -> vector<4x256xf32>
    %c1_i32_75 = arith.constant 1 : i32
    %200 = vector.broadcast %c1_i32_75 : i32 to vector<1x256xi32>
    %201 = arith.cmpi sge, %1, %200 : vector<1x256xi32>
    %cst_76 = arith.constant 0.000000e+00 : f32
    %202 = vector.shape_cast %201 : vector<1x256xi1> to vector<1x256xi1>
    %203 = vector.broadcast %202 : vector<1x256xi1> to vector<4x256xi1>
    %204 = vector.broadcast %cst_76 : f32 to vector<4x256xf32>
    %205 = arith.select %203, %199, %204 : vector<4x256xi1>, vector<4x256xf32>
    %c255_i32_77 = arith.constant 255 : i32
    %206 = tpu.dynamic_rotate %97 by %c255_i32_77 dim 1 : vector<4x256xf32>, i32 -> vector<4x256xf32>
    %c15_i32_78 = arith.constant 15 : i32
    %207 = vector.broadcast %c15_i32_78 : i32 to vector<1x256xi32>
    %208 = arith.cmpi slt, %1, %207 : vector<1x256xi32>
    %cst_79 = arith.constant 0.000000e+00 : f32
    %209 = vector.shape_cast %208 : vector<1x256xi1> to vector<1x256xi1>
    %210 = vector.broadcast %209 : vector<1x256xi1> to vector<4x256xi1>
    %211 = vector.broadcast %cst_79 : f32 to vector<4x256xf32>
    %212 = arith.select %210, %206, %211 : vector<4x256xi1>, vector<4x256xf32>
    %c254_i32 = arith.constant 254 : i32
    %213 = tpu.dynamic_rotate %97 by %c254_i32 dim 1 : vector<4x256xf32>, i32 -> vector<4x256xf32>
    %c14_i32_80 = arith.constant 14 : i32
    %214 = vector.broadcast %c14_i32_80 : i32 to vector<1x256xi32>
    %215 = arith.cmpi slt, %1, %214 : vector<1x256xi32>
    %cst_81 = arith.constant 0.000000e+00 : f32
    %216 = vector.shape_cast %215 : vector<1x256xi1> to vector<1x256xi1>
    %217 = vector.broadcast %216 : vector<1x256xi1> to vector<4x256xi1>
    %218 = vector.broadcast %cst_81 : f32 to vector<4x256xf32>
    %219 = arith.select %217, %213, %218 : vector<4x256xi1>, vector<4x256xf32>
    %c242_i32 = arith.constant 242 : i32
    %220 = tpu.dynamic_rotate %97 by %c242_i32 dim 1 : vector<4x256xf32>, i32 -> vector<4x256xf32>
    %c15_i32_82 = arith.constant 15 : i32
    %221 = vector.broadcast %c15_i32_82 : i32 to vector<1x256xi32>
    %222 = arith.cmpi slt, %0, %221 : vector<1x256xi32>
    %c2_i32_83 = arith.constant 2 : i32
    %223 = vector.broadcast %c2_i32_83 : i32 to vector<1x256xi32>
    %224 = arith.cmpi sge, %1, %223 : vector<1x256xi32>
    %225 = arith.andi %222, %224 : vector<1x256xi1>
    %cst_84 = arith.constant 0.000000e+00 : f32
    %226 = vector.shape_cast %225 : vector<1x256xi1> to vector<1x256xi1>
    %227 = vector.broadcast %226 : vector<1x256xi1> to vector<4x256xi1>
    %228 = vector.broadcast %cst_84 : f32 to vector<4x256xf32>
    %229 = arith.select %227, %220, %228 : vector<4x256xi1>, vector<4x256xf32>
    %c241_i32_85 = arith.constant 241 : i32
    %230 = tpu.dynamic_rotate %97 by %c241_i32_85 dim 1 : vector<4x256xf32>, i32 -> vector<4x256xf32>
    %c15_i32_86 = arith.constant 15 : i32
    %231 = vector.broadcast %c15_i32_86 : i32 to vector<1x256xi32>
    %232 = arith.cmpi slt, %0, %231 : vector<1x256xi32>
    %c1_i32_87 = arith.constant 1 : i32
    %233 = vector.broadcast %c1_i32_87 : i32 to vector<1x256xi32>
    %234 = arith.cmpi sge, %1, %233 : vector<1x256xi32>
    %235 = arith.andi %232, %234 : vector<1x256xi1>
    %cst_88 = arith.constant 0.000000e+00 : f32
    %236 = vector.shape_cast %235 : vector<1x256xi1> to vector<1x256xi1>
    %237 = vector.broadcast %236 : vector<1x256xi1> to vector<4x256xi1>
    %238 = vector.broadcast %cst_88 : f32 to vector<4x256xf32>
    %239 = arith.select %237, %230, %238 : vector<4x256xi1>, vector<4x256xf32>
    %c240_i32_89 = arith.constant 240 : i32
    %240 = tpu.dynamic_rotate %97 by %c240_i32_89 dim 1 : vector<4x256xf32>, i32 -> vector<4x256xf32>
    %c15_i32_90 = arith.constant 15 : i32
    %241 = vector.broadcast %c15_i32_90 : i32 to vector<1x256xi32>
    %242 = arith.cmpi slt, %0, %241 : vector<1x256xi32>
    %cst_91 = arith.constant 0.000000e+00 : f32
    %243 = vector.shape_cast %242 : vector<1x256xi1> to vector<1x256xi1>
    %244 = vector.broadcast %243 : vector<1x256xi1> to vector<4x256xi1>
    %245 = vector.broadcast %cst_91 : f32 to vector<4x256xf32>
    %246 = arith.select %244, %240, %245 : vector<4x256xi1>, vector<4x256xf32>
    %c239_i32_92 = arith.constant 239 : i32
    %247 = tpu.dynamic_rotate %97 by %c239_i32_92 dim 1 : vector<4x256xf32>, i32 -> vector<4x256xf32>
    %c15_i32_93 = arith.constant 15 : i32
    %248 = vector.broadcast %c15_i32_93 : i32 to vector<1x256xi32>
    %249 = arith.cmpi slt, %0, %248 : vector<1x256xi32>
    %c15_i32_94 = arith.constant 15 : i32
    %250 = vector.broadcast %c15_i32_94 : i32 to vector<1x256xi32>
    %251 = arith.cmpi slt, %1, %250 : vector<1x256xi32>
    %252 = arith.andi %249, %251 : vector<1x256xi1>
    %cst_95 = arith.constant 0.000000e+00 : f32
    %253 = vector.shape_cast %252 : vector<1x256xi1> to vector<1x256xi1>
    %254 = vector.broadcast %253 : vector<1x256xi1> to vector<4x256xi1>
    %255 = vector.broadcast %cst_95 : f32 to vector<4x256xf32>
    %256 = arith.select %254, %247, %255 : vector<4x256xi1>, vector<4x256xf32>
    %c238_i32 = arith.constant 238 : i32
    %257 = tpu.dynamic_rotate %97 by %c238_i32 dim 1 : vector<4x256xf32>, i32 -> vector<4x256xf32>
    %c15_i32_96 = arith.constant 15 : i32
    %258 = vector.broadcast %c15_i32_96 : i32 to vector<1x256xi32>
    %259 = arith.cmpi slt, %0, %258 : vector<1x256xi32>
    %c14_i32_97 = arith.constant 14 : i32
    %260 = vector.broadcast %c14_i32_97 : i32 to vector<1x256xi32>
    %261 = arith.cmpi slt, %1, %260 : vector<1x256xi32>
    %262 = arith.andi %259, %261 : vector<1x256xi1>
    %cst_98 = arith.constant 0.000000e+00 : f32
    %263 = vector.shape_cast %262 : vector<1x256xi1> to vector<1x256xi1>
    %264 = vector.broadcast %263 : vector<1x256xi1> to vector<4x256xi1>
    %265 = vector.broadcast %cst_98 : f32 to vector<4x256xf32>
    %266 = arith.select %264, %257, %265 : vector<4x256xi1>, vector<4x256xf32>
    %c226_i32 = arith.constant 226 : i32
    %267 = tpu.dynamic_rotate %97 by %c226_i32 dim 1 : vector<4x256xf32>, i32 -> vector<4x256xf32>
    %c14_i32_99 = arith.constant 14 : i32
    %268 = vector.broadcast %c14_i32_99 : i32 to vector<1x256xi32>
    %269 = arith.cmpi slt, %0, %268 : vector<1x256xi32>
    %c2_i32_100 = arith.constant 2 : i32
    %270 = vector.broadcast %c2_i32_100 : i32 to vector<1x256xi32>
    %271 = arith.cmpi sge, %1, %270 : vector<1x256xi32>
    %272 = arith.andi %269, %271 : vector<1x256xi1>
    %cst_101 = arith.constant 0.000000e+00 : f32
    %273 = vector.shape_cast %272 : vector<1x256xi1> to vector<1x256xi1>
    %274 = vector.broadcast %273 : vector<1x256xi1> to vector<4x256xi1>
    %275 = vector.broadcast %cst_101 : f32 to vector<4x256xf32>
    %276 = arith.select %274, %267, %275 : vector<4x256xi1>, vector<4x256xf32>
    %c225_i32 = arith.constant 225 : i32
    %277 = tpu.dynamic_rotate %97 by %c225_i32 dim 1 : vector<4x256xf32>, i32 -> vector<4x256xf32>
    %c14_i32_102 = arith.constant 14 : i32
    %278 = vector.broadcast %c14_i32_102 : i32 to vector<1x256xi32>
    %279 = arith.cmpi slt, %0, %278 : vector<1x256xi32>
    %c1_i32_103 = arith.constant 1 : i32
    %280 = vector.broadcast %c1_i32_103 : i32 to vector<1x256xi32>
    %281 = arith.cmpi sge, %1, %280 : vector<1x256xi32>
    %282 = arith.andi %279, %281 : vector<1x256xi1>
    %cst_104 = arith.constant 0.000000e+00 : f32
    %283 = vector.shape_cast %282 : vector<1x256xi1> to vector<1x256xi1>
    %284 = vector.broadcast %283 : vector<1x256xi1> to vector<4x256xi1>
    %285 = vector.broadcast %cst_104 : f32 to vector<4x256xf32>
    %286 = arith.select %284, %277, %285 : vector<4x256xi1>, vector<4x256xf32>
    %c224_i32 = arith.constant 224 : i32
    %287 = tpu.dynamic_rotate %97 by %c224_i32 dim 1 : vector<4x256xf32>, i32 -> vector<4x256xf32>
    %c14_i32_105 = arith.constant 14 : i32
    %288 = vector.broadcast %c14_i32_105 : i32 to vector<1x256xi32>
    %289 = arith.cmpi slt, %0, %288 : vector<1x256xi32>
    %cst_106 = arith.constant 0.000000e+00 : f32
    %290 = vector.shape_cast %289 : vector<1x256xi1> to vector<1x256xi1>
    %291 = vector.broadcast %290 : vector<1x256xi1> to vector<4x256xi1>
    %292 = vector.broadcast %cst_106 : f32 to vector<4x256xf32>
    %293 = arith.select %291, %287, %292 : vector<4x256xi1>, vector<4x256xf32>
    %c223_i32 = arith.constant 223 : i32
    %294 = tpu.dynamic_rotate %97 by %c223_i32 dim 1 : vector<4x256xf32>, i32 -> vector<4x256xf32>
    %c14_i32_107 = arith.constant 14 : i32
    %295 = vector.broadcast %c14_i32_107 : i32 to vector<1x256xi32>
    %296 = arith.cmpi slt, %0, %295 : vector<1x256xi32>
    %c15_i32_108 = arith.constant 15 : i32
    %297 = vector.broadcast %c15_i32_108 : i32 to vector<1x256xi32>
    %298 = arith.cmpi slt, %1, %297 : vector<1x256xi32>
    %299 = arith.andi %296, %298 : vector<1x256xi1>
    %cst_109 = arith.constant 0.000000e+00 : f32
    %300 = vector.shape_cast %299 : vector<1x256xi1> to vector<1x256xi1>
    %301 = vector.broadcast %300 : vector<1x256xi1> to vector<4x256xi1>
    %302 = vector.broadcast %cst_109 : f32 to vector<4x256xf32>
    %303 = arith.select %301, %294, %302 : vector<4x256xi1>, vector<4x256xf32>
    %c222_i32 = arith.constant 222 : i32
    %304 = tpu.dynamic_rotate %97 by %c222_i32 dim 1 : vector<4x256xf32>, i32 -> vector<4x256xf32>
    %c14_i32_110 = arith.constant 14 : i32
    %305 = vector.broadcast %c14_i32_110 : i32 to vector<1x256xi32>
    %306 = arith.cmpi slt, %0, %305 : vector<1x256xi32>
    %c14_i32_111 = arith.constant 14 : i32
    %307 = vector.broadcast %c14_i32_111 : i32 to vector<1x256xi32>
    %308 = arith.cmpi slt, %1, %307 : vector<1x256xi32>
    %309 = arith.andi %306, %308 : vector<1x256xi1>
    %cst_112 = arith.constant 0.000000e+00 : f32
    %310 = vector.shape_cast %309 : vector<1x256xi1> to vector<1x256xi1>
    %311 = vector.broadcast %310 : vector<1x256xi1> to vector<4x256xi1>
    %312 = vector.broadcast %cst_112 : f32 to vector<4x256xf32>
    %313 = arith.select %311, %304, %312 : vector<4x256xi1>, vector<4x256xf32>
    %314 = tpu.concatenate %107, %117, %124, %134, %144, %154, %164, %171, %181, %191, %198, %205, %97, %212, %219, %229 in 0 : vector<4x256xf32>, vector<4x256xf32>, vector<4x256xf32>, vector<4x256xf32>, vector<4x256xf32>, vector<4x256xf32>, vector<4x256xf32>, vector<4x256xf32>, vector<4x256xf32>, vector<4x256xf32>, vector<4x256xf32>, vector<4x256xf32>, vector<4x256xf32>, vector<4x256xf32>, vector<4x256xf32>, vector<4x256xf32> -> vector<64x256xf32>
    %315 = tpu.concatenate %239, %246, %256, %266, %276, %286, %293, %303, %313 in 0 : vector<4x256xf32>, vector<4x256xf32>, vector<4x256xf32>, vector<4x256xf32>, vector<4x256xf32>, vector<4x256xf32>, vector<4x256xf32>, vector<4x256xf32>, vector<4x256xf32> -> vector<36x256xf32>
    %316 = tpu.concatenate %314, %315 in 0 : vector<64x256xf32>, vector<36x256xf32> -> vector<100x256xf32>
    %317 = arith.truncf %316 : vector<100x256xf32> to vector<100x256xbf16>
    %c0_113 = arith.constant 0 : index
    %c0_114 = arith.constant 0 : index
    %318 = vector.load %arg7[%c0_113, %c0_114] : memref<8x100xbf16, #tpu.memory_space<vmem>>, vector<8x100xbf16>
    %cst_115 = arith.constant dense<0.000000e+00> : vector<8x256xf32>
    %319 = tpu.matmul %318, %317, %cst_115 {dimension_numbers = #tpu.dot_dimension_numbers<[1], [0], [0], [1], [0, 0, 1, 1], [], []>} : vector<8x100xbf16>, vector<100x256xbf16>, vector<8x256xf32> -> vector<8x256xf32>
    %c0_116 = arith.constant 0 : index
    %c0_117 = arith.constant 0 : index
    %320 = vector.load %arg8[%c0_116, %c0_117] : memref<8x1xf32, #tpu.memory_space<vmem>>, vector<8x1xf32>
    %321 = vector.broadcast %320 : vector<8x1xf32> to vector<8x256xf32>
    %322 = arith.addf %319, %321 : vector<8x256xf32>
    %cst_118 = arith.constant 0.000000e+00 : f32
    %323 = vector.broadcast %cst_118 : f32 to vector<8x256xf32>
    %324 = arith.maximumf %322, %323 : vector<8x256xf32>
    %c0_119 = arith.constant 0 : index
    %c16 = arith.constant 16 : index
    %c0_120 = arith.constant 0 : index
    %325 = vector.load %arg11[%c0_119, %c16, %c0_120] : memref<1x32x256xf32, #tpu.memory_space<vmem>>, vector<1x8x256xf32>
    %326 = vector.shape_cast %325 : vector<1x8x256xf32> to vector<8x256xf32>
    %327 = vector.shape_cast %324 : vector<8x256xf32> to vector<1x8x256xf32>
    tpu.vector_store %arg11[%c0_119, %c16, %c0_120], %327 {strides = array<i32>} : memref<1x32x256xf32, #tpu.memory_space<vmem>>, vector<1x8x256xf32>,
    %c17_i32_121 = arith.constant 17 : i32
    %328 = tpu.dynamic_rotate %3 by %c17_i32_121 dim 1 : vector<4x256xf32>, i32 -> vector<4x256xf32>
    %c1_i32_122 = arith.constant 1 : i32
    %329 = vector.broadcast %c1_i32_122 : i32 to vector<1x256xi32>
    %330 = arith.cmpi sge, %0, %329 : vector<1x256xi32>
    %c1_i32_123 = arith.constant 1 : i32
    %331 = vector.broadcast %c1_i32_123 : i32 to vector<1x256xi32>
    %332 = arith.cmpi sge, %1, %331 : vector<1x256xi32>
    %333 = arith.andi %330, %332 : vector<1x256xi1>
    %cst_124 = arith.constant 0xFF800000 : f32
    %334 = vector.shape_cast %333 : vector<1x256xi1> to vector<1x256xi1>
    %335 = vector.broadcast %334 : vector<1x256xi1> to vector<4x256xi1>
    %336 = vector.broadcast %cst_124 : f32 to vector<4x256xf32>
    %337 = arith.select %335, %328, %336 : vector<4x256xi1>, vector<4x256xf32>
    %c16_i32_125 = arith.constant 16 : i32
    %338 = tpu.dynamic_rotate %3 by %c16_i32_125 dim 1 : vector<4x256xf32>, i32 -> vector<4x256xf32>
    %c1_i32_126 = arith.constant 1 : i32
    %339 = vector.broadcast %c1_i32_126 : i32 to vector<1x256xi32>
    %340 = arith.cmpi sge, %0, %339 : vector<1x256xi32>
    %cst_127 = arith.constant 0xFF800000 : f32
    %341 = vector.shape_cast %340 : vector<1x256xi1> to vector<1x256xi1>
    %342 = vector.broadcast %341 : vector<1x256xi1> to vector<4x256xi1>
    %343 = vector.broadcast %cst_127 : f32 to vector<4x256xf32>
    %344 = arith.select %342, %338, %343 : vector<4x256xi1>, vector<4x256xf32>
    %c15_i32_128 = arith.constant 15 : i32
    %345 = tpu.dynamic_rotate %3 by %c15_i32_128 dim 1 : vector<4x256xf32>, i32 -> vector<4x256xf32>
    %c1_i32_129 = arith.constant 1 : i32
    %346 = vector.broadcast %c1_i32_129 : i32 to vector<1x256xi32>
    %347 = arith.cmpi sge, %0, %346 : vector<1x256xi32>
    %c15_i32_130 = arith.constant 15 : i32
    %348 = vector.broadcast %c15_i32_130 : i32 to vector<1x256xi32>
    %349 = arith.cmpi slt, %1, %348 : vector<1x256xi32>
    %350 = arith.andi %347, %349 : vector<1x256xi1>
    %cst_131 = arith.constant 0xFF800000 : f32
    %351 = vector.shape_cast %350 : vector<1x256xi1> to vector<1x256xi1>
    %352 = vector.broadcast %351 : vector<1x256xi1> to vector<4x256xi1>
    %353 = vector.broadcast %cst_131 : f32 to vector<4x256xf32>
    %354 = arith.select %352, %345, %353 : vector<4x256xi1>, vector<4x256xf32>
    %c1_i32_132 = arith.constant 1 : i32
    %355 = tpu.dynamic_rotate %3 by %c1_i32_132 dim 1 : vector<4x256xf32>, i32 -> vector<4x256xf32>
    %c1_i32_133 = arith.constant 1 : i32
    %356 = vector.broadcast %c1_i32_133 : i32 to vector<1x256xi32>
    %357 = arith.cmpi sge, %1, %356 : vector<1x256xi32>
    %cst_134 = arith.constant 0xFF800000 : f32
    %358 = vector.shape_cast %357 : vector<1x256xi1> to vector<1x256xi1>
    %359 = vector.broadcast %358 : vector<1x256xi1> to vector<4x256xi1>
    %360 = vector.broadcast %cst_134 : f32 to vector<4x256xf32>
    %361 = arith.select %359, %355, %360 : vector<4x256xi1>, vector<4x256xf32>
    %c255_i32_135 = arith.constant 255 : i32
    %362 = tpu.dynamic_rotate %3 by %c255_i32_135 dim 1 : vector<4x256xf32>, i32 -> vector<4x256xf32>
    %c15_i32_136 = arith.constant 15 : i32
    %363 = vector.broadcast %c15_i32_136 : i32 to vector<1x256xi32>
    %364 = arith.cmpi slt, %1, %363 : vector<1x256xi32>
    %cst_137 = arith.constant 0xFF800000 : f32
    %365 = vector.shape_cast %364 : vector<1x256xi1> to vector<1x256xi1>
    %366 = vector.broadcast %365 : vector<1x256xi1> to vector<4x256xi1>
    %367 = vector.broadcast %cst_137 : f32 to vector<4x256xf32>
    %368 = arith.select %366, %362, %367 : vector<4x256xi1>, vector<4x256xf32>
    %c241_i32_138 = arith.constant 241 : i32
    %369 = tpu.dynamic_rotate %3 by %c241_i32_138 dim 1 : vector<4x256xf32>, i32 -> vector<4x256xf32>
    %c15_i32_139 = arith.constant 15 : i32
    %370 = vector.broadcast %c15_i32_139 : i32 to vector<1x256xi32>
    %371 = arith.cmpi slt, %0, %370 : vector<1x256xi32>
    %c1_i32_140 = arith.constant 1 : i32
    %372 = vector.broadcast %c1_i32_140 : i32 to vector<1x256xi32>
    %373 = arith.cmpi sge, %1, %372 : vector<1x256xi32>
    %374 = arith.andi %371, %373 : vector<1x256xi1>
    %cst_141 = arith.constant 0xFF800000 : f32
    %375 = vector.shape_cast %374 : vector<1x256xi1> to vector<1x256xi1>
    %376 = vector.broadcast %375 : vector<1x256xi1> to vector<4x256xi1>
    %377 = vector.broadcast %cst_141 : f32 to vector<4x256xf32>
    %378 = arith.select %376, %369, %377 : vector<4x256xi1>, vector<4x256xf32>
    %c240_i32_142 = arith.constant 240 : i32
    %379 = tpu.dynamic_rotate %3 by %c240_i32_142 dim 1 : vector<4x256xf32>, i32 -> vector<4x256xf32>
    %c15_i32_143 = arith.constant 15 : i32
    %380 = vector.broadcast %c15_i32_143 : i32 to vector<1x256xi32>
    %381 = arith.cmpi slt, %0, %380 : vector<1x256xi32>
    %cst_144 = arith.constant 0xFF800000 : f32
    %382 = vector.shape_cast %381 : vector<1x256xi1> to vector<1x256xi1>
    %383 = vector.broadcast %382 : vector<1x256xi1> to vector<4x256xi1>
    %384 = vector.broadcast %cst_144 : f32 to vector<4x256xf32>
    %385 = arith.select %383, %379, %384 : vector<4x256xi1>, vector<4x256xf32>
    %c239_i32_145 = arith.constant 239 : i32
    %386 = tpu.dynamic_rotate %3 by %c239_i32_145 dim 1 : vector<4x256xf32>, i32 -> vector<4x256xf32>
    %c15_i32_146 = arith.constant 15 : i32
    %387 = vector.broadcast %c15_i32_146 : i32 to vector<1x256xi32>
    %388 = arith.cmpi slt, %0, %387 : vector<1x256xi32>
    %c15_i32_147 = arith.constant 15 : i32
    %389 = vector.broadcast %c15_i32_147 : i32 to vector<1x256xi32>
    %390 = arith.cmpi slt, %1, %389 : vector<1x256xi32>
    %391 = arith.andi %388, %390 : vector<1x256xi1>
    %cst_148 = arith.constant 0xFF800000 : f32
    %392 = vector.shape_cast %391 : vector<1x256xi1> to vector<1x256xi1>
    %393 = vector.broadcast %392 : vector<1x256xi1> to vector<4x256xi1>
    %394 = vector.broadcast %cst_148 : f32 to vector<4x256xf32>
    %395 = arith.select %393, %386, %394 : vector<4x256xi1>, vector<4x256xf32>
    %396 = arith.maximumf %337, %344 : vector<4x256xf32>
    %397 = arith.maximumf %396, %354 : vector<4x256xf32>
    %398 = arith.maximumf %397, %361 : vector<4x256xf32>
    %399 = arith.maximumf %398, %3 : vector<4x256xf32>
    %400 = arith.maximumf %399, %368 : vector<4x256xf32>
    %401 = arith.maximumf %400, %378 : vector<4x256xf32>
    %402 = arith.maximumf %401, %385 : vector<4x256xf32>
    %403 = arith.maximumf %402, %395 : vector<4x256xf32>
    %c0_149 = arith.constant 0 : index
    %c0_150 = arith.constant 0 : index
    %404 = vector.load %arg9[%c0_149, %c0_150] : memref<8x4xbf16, #tpu.memory_space<vmem>>, vector<8x4xbf16>
    %405 = arith.truncf %403 : vector<4x256xf32> to vector<4x256xbf16>
    %cst_151 = arith.constant dense<0.000000e+00> : vector<8x256xf32>
    %406 = tpu.matmul %404, %405, %cst_151 {dimension_numbers = #tpu.dot_dimension_numbers<[1], [0], [0], [1], [0, 0, 1, 1], [], []>} : vector<8x4xbf16>, vector<4x256xbf16>, vector<8x256xf32> -> vector<8x256xf32>
    %c0_152 = arith.constant 0 : index
    %c0_153 = arith.constant 0 : index
    %407 = vector.load %arg10[%c0_152, %c0_153] : memref<8x1xf32, #tpu.memory_space<vmem>>, vector<8x1xf32>
    %408 = vector.broadcast %407 : vector<8x1xf32> to vector<8x256xf32>
    %409 = arith.addf %406, %408 : vector<8x256xf32>
    %cst_154 = arith.constant 0.000000e+00 : f32
    %410 = vector.broadcast %cst_154 : f32 to vector<8x256xf32>
    %411 = arith.maximumf %409, %410 : vector<8x256xf32>
    %c0_155 = arith.constant 0 : index
    %c24 = arith.constant 24 : index
    %c0_156 = arith.constant 0 : index
    %412 = vector.load %arg11[%c0_155, %c24, %c0_156] : memref<1x32x256xf32, #tpu.memory_space<vmem>>, vector<1x8x256xf32>
    %413 = vector.shape_cast %412 : vector<1x8x256xf32> to vector<8x256xf32>
    %414 = vector.shape_cast %411 : vector<8x256xf32> to vector<1x8x256xf32>
    tpu.vector_store %arg11[%c0_155, %c24, %c0_156], %414 {strides = array<i32>} : memref<1x32x256xf32, #tpu.memory_space<vmem>>, vector<1x8x256xf32>,
    return
  }
  func.func @transform_0(%arg0: i32) -> (i32, i32, i32) {
    %c0_i32 = arith.constant 0 : i32
    %c0_i32_0 = arith.constant 0 : i32
    %c0_i32_1 = arith.constant 0 : i32
    return %arg0, %c0_i32, %c0_i32_0 : i32, i32, i32
  }
  func.func @transform_1(%arg0: i32) -> (i32, i32) {
    %c0_i32 = arith.constant 0 : i32
    %c0_i32_0 = arith.constant 0 : i32
    %c0_i32_1 = arith.constant 0 : i32
    return %c0_i32, %c0_i32_0 : i32, i32
  }
  func.func @transform_2(%arg0: i32) -> (i32, i32) {
    %c0_i32 = arith.constant 0 : i32
    %c0_i32_0 = arith.constant 0 : i32
    %c0_i32_1 = arith.constant 0 : i32
    return %c0_i32, %c0_i32_0 : i32, i32
  }
  func.func @transform_3(%arg0: i32) -> (i32, i32) {
    %c0_i32 = arith.constant 0 : i32
    %c0_i32_0 = arith.constant 0 : i32
    %c0_i32_1 = arith.constant 0 : i32
    return %c0_i32, %c0_i32_0 : i32, i32
  }
  func.func @transform_4(%arg0: i32) -> (i32, i32) {
    %c0_i32 = arith.constant 0 : i32
    %c0_i32_0 = arith.constant 0 : i32
    %c0_i32_1 = arith.constant 0 : i32
    return %c0_i32, %c0_i32_0 : i32, i32
  }
  func.func @transform_5(%arg0: i32) -> (i32, i32) {
    %c0_i32 = arith.constant 0 : i32
    %c0_i32_0 = arith.constant 0 : i32
    %c0_i32_1 = arith.constant 0 : i32
    return %c0_i32, %c0_i32_0 : i32, i32
  }
  func.func @transform_6(%arg0: i32) -> (i32, i32) {
    %c0_i32 = arith.constant 0 : i32
    %c0_i32_0 = arith.constant 0 : i32
    %c0_i32_1 = arith.constant 0 : i32
    return %c0_i32, %c0_i32_0 : i32, i32
  }
  func.func @transform_7(%arg0: i32) -> (i32, i32) {
    %c0_i32 = arith.constant 0 : i32
    %c0_i32_0 = arith.constant 0 : i32
    %c0_i32_1 = arith.constant 0 : i32
    return %c0_i32, %c0_i32_0 : i32, i32
  }
  func.func @transform_8(%arg0: i32) -> (i32, i32) {
    %c0_i32 = arith.constant 0 : i32
    %c0_i32_0 = arith.constant 0 : i32
    %c0_i32_1 = arith.constant 0 : i32
    return %c0_i32, %c0_i32_0 : i32, i32
  }
  func.func @transform_9(%arg0: i32) -> (i32, i32) {
    %c0_i32 = arith.constant 0 : i32
    %c0_i32_0 = arith.constant 0 : i32
    %c0_i32_1 = arith.constant 0 : i32
    return %c0_i32, %c0_i32_0 : i32, i32
  }
  func.func @transform_10(%arg0: i32) -> (i32, i32, i32) {
    %c0_i32 = arith.constant 0 : i32
    %c0_i32_0 = arith.constant 0 : i32
    %c0_i32_1 = arith.constant 0 : i32
    return %arg0, %c0_i32, %c0_i32_0 : i32, i32, i32
  }
}

</mosaic_0001>

<llo_original>
// kernel: inceptionv1_forward.1
$region0: #{inceptionv1_forward.1}
  #allocation0 [shape = 'u32[]', space=smem, size = 0x4, offset = 0x4, fixed_abs, tag = 'smem constant byte address 0x4 - core index']
  #allocation1 [shape = 'u32[144,128]{1,0:T(1,128)}', space=vmem, size = 0x12000, scoped, tag = 'internal scratch']
  %s0 = inlined_call_operand.vmem [shape: f32[2,4,256], index: 0, kind: input, shape index: {}]
  %s1 = inlined_call_operand.vmem [shape: s32[2,256], index: 1, kind: input, shape index: {}]
  %s2 = inlined_call_operand.vmem [shape: bf16[16,4], index: 2, kind: input, shape index: {}]
  %s3 = inlined_call_operand.vmem [shape: f32[16,1], index: 3, kind: input, shape index: {}]
  %s4 = inlined_call_operand.vmem [shape: bf16[8,36], index: 4, kind: input, shape index: {}]
  %s5 = inlined_call_operand.vmem [shape: f32[8,1], index: 5, kind: input, shape index: {}]
  %s6 = inlined_call_operand.vmem [shape: bf16[8,100], index: 6, kind: input, shape index: {}]
  %s7 = inlined_call_operand.vmem [shape: f32[8,1], index: 7, kind: input, shape index: {}]
  %s8 = inlined_call_operand.vmem [shape: bf16[8,4], index: 8, kind: input, shape index: {}]
  %s9 = inlined_call_operand.vmem [shape: f32[8,1], index: 9, kind: input, shape index: {}]
  %s10 = inlined_call_operand.vmem [shape: f32[2,32,256], index: 10, kind: output, shape index: {}]
  %s11 = sld [smem:[#allocation0]]
  $region73: #{inceptionv1_forward.1} parent=0
    _
  %s13 = ssub.s32 1, %s11
  %s14 = scalar_select 0, %s13, %s11
  loop: start=0, step=1, limit=4
  $region2: #{inceptionv1_forward.1} parent=0 // loop_pre_header
    _
  $region3: #{inceptionv1_forward.1} parent=0 // loop_header
    %s16 = sphi 0, %s20
    %p17 = scmp.ge.s32.totalorder %s16, 4
    %s26 = sphi 0, %s28
    %s29 = sphi 0, %s26
    %s30 = sphi 0, %s29
    %s46 = sphi 0, %s30
    %s50 = sphi 0, %s50
    %s52 = sphi 0, %s50
    %s53 = sphi 0, %s52
    %s67 = sphi 0, %s53
    %s71 = sphi 0, %s71
    %s73 = sphi 0, %s71
    %s74 = sphi 0, %s73
    %s88 = sphi 0, %s74
    %s92 = sphi 0, %s92
    %s94 = sphi 0, %s92
    %s95 = sphi 0, %s94
    %s109 = sphi 0, %s95
    %s113 = sphi 0, %s113
    %s115 = sphi 0, %s113
    %s116 = sphi 0, %s115
    %s130 = sphi 0, %s116
    %s134 = sphi 0, %s134
    %s136 = sphi 0, %s134
    %s137 = sphi 0, %s136
    %s151 = sphi 0, %s137
    %s155 = sphi 0, %s155
    %s157 = sphi 0, %s155
    %s158 = sphi 0, %s157
    %s172 = sphi 0, %s158
    %s176 = sphi 0, %s176
    %s178 = sphi 0, %s176
    %s179 = sphi 0, %s178
    %s193 = sphi 0, %s179
    %s197 = sphi 0, %s197
    %s199 = sphi 0, %s197
    %s200 = sphi 0, %s199
    %s214 = sphi 0, %s200
    %s218 = sphi 0, %s218
    %s220 = sphi 0, %s218
    %s221 = sphi 0, %s220
    %s235 = sphi 0, %s221
    %s241 = sphi 0, %s243
    %s244 = sphi 0, %s241
    %s245 = sphi 0, %s244
    %s261 = sphi 0, %s245
  $region4: #{inceptionv1_forward.1} parent=0 // loop_header_branch
    %19 = sbr.rel (%p17) target = $region8
  $region5: #{inceptionv1_forward.1} parent=0 // loop_body
    %s21 = ssub.s32 %s16, 1
    %s22 = ssub.s32 %s16, 2
    %s23 = sadd.s32 %s16, 1
    %s24 = ssub.s32 %s16, %s23
    %p25 = scmp.eq.s32.totalorder %s24, 0
    %s27 = sadd.s32 %s26, 1
    %s28 = scalar_select %p25, %s26, %s27
    %p31 = pneg %p25
    %p32 = scmp.eq.s32.totalorder %s16, 1
    %p33 = por %p31, %p32
    %p34 = scmp.ne.s32.totalorder %s26, %s29
    %p35 = scmp.eq.s32.totalorder %s16, 0
    %p36 = por %p34, %p35
    %p37 = scmp.ne.s32.totalorder %s26, %s29
    %p38 = scmp.eq.s32.totalorder %s21, 1
    %p39 = por %p37, %p38
    %p40 = scmp.ne.s32.totalorder %s29, %s30
    %p41 = scmp.eq.s32.totalorder %s21, 0
    %p42 = por %p40, %p41
    %p43 = scmp.ne.s32.totalorder %s29, %s30
    %p44 = scmp.eq.s32.totalorder %s22, 1
    %p45 = por %p43, %p44
    %p47 = scmp.ne.s32.totalorder %s30, %s46
    %p48 = scmp.eq.s32.totalorder %s22, 0
    %p49 = por %p47, %p48
    %s51 = sadd.s32 %s50, 1
    %p54 = scmp.eq.s32.totalorder %s16, 1
    %p55 = scmp.ne.s32.totalorder %s50, %s52
    %p56 = scmp.eq.s32.totalorder %s16, 0
    %p57 = por %p55, %p56
    %p58 = scmp.ne.s32.totalorder %s50, %s52
    %p59 = scmp.eq.s32.totalorder %s21, 1
    %p60 = por %p58, %p59
    %p61 = scmp.ne.s32.totalorder %s52, %s53
    %p62 = scmp.eq.s32.totalorder %s21, 0
    %p63 = por %p61, %p62
    %p64 = scmp.ne.s32.totalorder %s52, %s53
    %p65 = scmp.eq.s32.totalorder %s22, 1
    %p66 = por %p64, %p65
    %p68 = scmp.ne.s32.totalorder %s53, %s67
    %p69 = scmp.eq.s32.totalorder %s22, 0
    %p70 = por %p68, %p69
    %s72 = sadd.s32 %s71, 1
    %p75 = scmp.eq.s32.totalorder %s16, 1
    %p76 = scmp.ne.s32.totalorder %s71, %s73
    %p77 = scmp.eq.s32.totalorder %s16, 0
    %p78 = por %p76, %p77
    %p79 = scmp.ne.s32.totalorder %s71, %s73
    %p80 = scmp.eq.s32.totalorder %s21, 1
    %p81 = por %p79, %p80
    %p82 = scmp.ne.s32.totalorder %s73, %s74
    %p83 = scmp.eq.s32.totalorder %s21, 0
    %p84 = por %p82, %p83
    %p85 = scmp.ne.s32.totalorder %s73, %s74
    %p86 = scmp.eq.s32.totalorder %s22, 1
    %p87 = por %p85, %p86
    %p89 = scmp.ne.s32.totalorder %s74, %s88
    %p90 = scmp.eq.s32.totalorder %s22, 0
    %p91 = por %p89, %p90
    %s93 = sadd.s32 %s92, 1
    %p96 = scmp.eq.s32.totalorder %s16, 1
    %p97 = scmp.ne.s32.totalorder %s92, %s94
    %p98 = scmp.eq.s32.totalorder %s16, 0
    %p99 = por %p97, %p98
    %p100 = scmp.ne.s32.totalorder %s92, %s94
    %p101 = scmp.eq.s32.totalorder %s21, 1
    %p102 = por %p100, %p101
    %p103 = scmp.ne.s32.totalorder %s94, %s95
    %p104 = scmp.eq.s32.totalorder %s21, 0
    %p105 = por %p103, %p104
    %p106 = scmp.ne.s32.totalorder %s94, %s95
    %p107 = scmp.eq.s32.totalorder %s22, 1
    %p108 = por %p106, %p107
    %p110 = scmp.ne.s32.totalorder %s95, %s109
    %p111 = scmp.eq.s32.totalorder %s22, 0
    %p112 = por %p110, %p111
    %s114 = sadd.s32 %s113, 1
    %p117 = scmp.eq.s32.totalorder %s16, 1
    %p118 = scmp.ne.s32.totalorder %s113, %s115
    %p119 = scmp.eq.s32.totalorder %s16, 0
    %p120 = por %p118, %p119
    %p121 = scmp.ne.s32.totalorder %s113, %s115
    %p122 = scmp.eq.s32.totalorder %s21, 1
    %p123 = por %p121, %p122
    %p124 = scmp.ne.s32.totalorder %s115, %s116
    %p125 = scmp.eq.s32.totalorder %s21, 0
    %p126 = por %p124, %p125
    %p127 = scmp.ne.s32.totalorder %s115, %s116
    %p128 = scmp.eq.s32.totalorder %s22, 1
    %p129 = por %p127, %p128
    %p131 = scmp.ne.s32.totalorder %s116, %s130
    %p132 = scmp.eq.s32.totalorder %s22, 0
    %p133 = por %p131, %p132
    %s135 = sadd.s32 %s134, 1
    %p138 = scmp.eq.s32.totalorder %s16, 1
    %p139 = scmp.ne.s32.totalorder %s134, %s136
    %p140 = scmp.eq.s32.totalorder %s16, 0
    %p141 = por %p139, %p140
    %p142 = scmp.ne.s32.totalorder %s134, %s136
    %p143 = scmp.eq.s32.totalorder %s21, 1
    %p144 = por %p142, %p143
    %p145 = scmp.ne.s32.totalorder %s136, %s137
    %p146 = scmp.eq.s32.totalorder %s21, 0
    %p147 = por %p145, %p146
    %p148 = scmp.ne.s32.totalorder %s136, %s137
    %p149 = scmp.eq.s32.totalorder %s22, 1
    %p150 = por %p148, %p149
    %p152 = scmp.ne.s32.totalorder %s137, %s151
    %p153 = scmp.eq.s32.totalorder %s22, 0
    %p154 = por %p152, %p153
    %s156 = sadd.s32 %s155, 1
    %p159 = scmp.eq.s32.totalorder %s16, 1
    %p160 = scmp.ne.s32.totalorder %s155, %s157
    %p161 = scmp.eq.s32.totalorder %s16, 0
    %p162 = por %p160, %p161
    %p163 = scmp.ne.s32.totalorder %s155, %s157
    %p164 = scmp.eq.s32.totalorder %s21, 1
    %p165 = por %p163, %p164
    %p166 = scmp.ne.s32.totalorder %s157, %s158
    %p167 = scmp.eq.s32.totalorder %s21, 0
    %p168 = por %p166, %p167
    %p169 = scmp.ne.s32.totalorder %s157, %s158
    %p170 = scmp.eq.s32.totalorder %s22, 1
    %p171 = por %p169, %p170
    %p173 = scmp.ne.s32.totalorder %s158, %s172
    %p174 = scmp.eq.s32.totalorder %s22, 0
    %p175 = por %p173, %p174
    %s177 = sadd.s32 %s176, 1
    %p180 = scmp.eq.s32.totalorder %s16, 1
    %p181 = scmp.ne.s32.totalorder %s176, %s178
    %p182 = scmp.eq.s32.totalorder %s16, 0
    %p183 = por %p181, %p182
    %p184 = scmp.ne.s32.totalorder %s176, %s178
    %p185 = scmp.eq.s32.totalorder %s21, 1
    %p186 = por %p184, %p185
    %p187 = scmp.ne.s32.totalorder %s178, %s179
    %p188 = scmp.eq.s32.totalorder %s21, 0
    %p189 = por %p187, %p188
    %p190 = scmp.ne.s32.totalorder %s178, %s179
    %p191 = scmp.eq.s32.totalorder %s22, 1
    %p192 = por %p190, %p191
    %p194 = scmp.ne.s32.totalorder %s179, %s193
    %p195 = scmp.eq.s32.totalorder %s22, 0
    %p196 = por %p194, %p195
    %s198 = sadd.s32 %s197, 1
    %p201 = scmp.eq.s32.totalorder %s16, 1
    %p202 = scmp.ne.s32.totalorder %s197, %s199
    %p203 = scmp.eq.s32.totalorder %s16, 0
    %p204 = por %p202, %p203
    %p205 = scmp.ne.s32.totalorder %s197, %s199
    %p206 = scmp.eq.s32.totalorder %s21, 1
    %p207 = por %p205, %p206
    %p208 = scmp.ne.s32.totalorder %s199, %s200
    %p209 = scmp.eq.s32.totalorder %s21, 0
    %p210 = por %p208, %p209
    %p211 = scmp.ne.s32.totalorder %s199, %s200
    %p212 = scmp.eq.s32.totalorder %s22, 1
    %p213 = por %p211, %p212
    %p215 = scmp.ne.s32.totalorder %s200, %s214
    %p216 = scmp.eq.s32.totalorder %s22, 0
    %p217 = por %p215, %p216
    %s219 = sadd.s32 %s218, 1
    %p222 = scmp.eq.s32.totalorder %s16, 1
    %p223 = scmp.ne.s32.totalorder %s218, %s220
    %p224 = scmp.eq.s32.totalorder %s16, 0
    %p225 = por %p223, %p224
    %p226 = scmp.ne.s32.totalorder %s218, %s220
    %p227 = scmp.eq.s32.totalorder %s21, 1
    %p228 = por %p226, %p227
    %p229 = scmp.ne.s32.totalorder %s220, %s221
    %p230 = scmp.eq.s32.totalorder %s21, 0
    %p231 = por %p229, %p230
    %p232 = scmp.ne.s32.totalorder %s220, %s221
    %p233 = scmp.eq.s32.totalorder %s22, 1
    %p234 = por %p232, %p233
    %p236 = scmp.ne.s32.totalorder %s221, %s235
    %p237 = scmp.eq.s32.totalorder %s22, 0
    %p238 = por %p236, %p237
    %s239 = ssub.s32 %s16, %s23
    %p240 = scmp.eq.s32.totalorder %s239, 0
    %s242 = sadd.s32 %s241, 1
    %s243 = scalar_select %p240, %s241, %s242
    %p246 = pneg %p240
    %p247 = scmp.eq.s32.totalorder %s16, 1
    %p248 = por %p246, %p247
    %p249 = scmp.ne.s32.totalorder %s241, %s244
    %p250 = scmp.eq.s32.totalorder %s16, 0
    %p251 = por %p249, %p250
    %p252 = scmp.ne.s32.totalorder %s241, %s244
    %p253 = scmp.eq.s32.totalorder %s21, 1
    %p254 = por %p252, %p253
    %p255 = scmp.ne.s32.totalorder %s244, %s245
    %p256 = scmp.eq.s32.totalorder %s21, 0
    %p257 = por %p255, %p256
    %p258 = scmp.ne.s32.totalorder %s244, %s245
    %p259 = scmp.eq.s32.totalorder %s22, 1
    %p260 = por %p258, %p259
    %p262 = scmp.ne.s32.totalorder %s245, %s261
    %p263 = scmp.eq.s32.totalorder %s22, 0
    %p264 = por %p262, %p263
    %p265 = scmp.le.s32.totalorder 1, %s16
    %p266 = scmp.lt.s32.totalorder %s16, 3
    %p267 = pnand %p265, %p266
    %p268 = pneg %p267
    // Predicated region
    $region9: #{inceptionv1_forward.1} parent=5 // pred_check
      _
    $region10: #{inceptionv1_forward.1} parent=5 // pred_check_branch
      %270 = sbr.rel (%p267) target = $region12
    $region11: #{inceptionv1_forward.1} parent=5 // pred_region
      %s271 = ssub.s32 %s16, 1
      // Predicated region
      $region13: #{inceptionv1_forward.1} parent=11 // pred_check
        %p272 = pneg %p63
      $region14: #{inceptionv1_forward.1} parent=11 // pred_check_branch
        %274 = sbr.rel (%p272) target = $region16
      $region15: #{inceptionv1_forward.1} parent=11 // pred_region
        _
      $region16: #{inceptionv1_forward.1} parent=11 // pred_fallthru
        _
      // Predicated region
      $region17: #{inceptionv1_forward.1} parent=11 // pred_check
        %p275 = pneg %p84
      $region18: #{inceptionv1_forward.1} parent=11 // pred_check_branch
        %277 = sbr.rel (%p275) target = $region20
      $region19: #{inceptionv1_forward.1} parent=11 // pred_region
        _
      $region20: #{inceptionv1_forward.1} parent=11 // pred_fallthru
        _
      // Predicated region
      $region21: #{inceptionv1_forward.1} parent=11 // pred_check
        %p278 = pneg %p105
      $region22: #{inceptionv1_forward.1} parent=11 // pred_check_branch
        %280 = sbr.rel (%p278) target = $region24
      $region23: #{inceptionv1_forward.1} parent=11 // pred_region
        _
      $region24: #{inceptionv1_forward.1} parent=11 // pred_fallthru
        _
      // Predicated region
      $region25: #{inceptionv1_forward.1} parent=11 // pred_check
        %p281 = pneg %p126
      $region26: #{inceptionv1_forward.1} parent=11 // pred_check_branch
        %283 = sbr.rel (%p281) target = $region28
      $region27: #{inceptionv1_forward.1} parent=11 // pred_region
        _
      $region28: #{inceptionv1_forward.1} parent=11 // pred_fallthru
        _
      // Predicated region
      $region29: #{inceptionv1_forward.1} parent=11 // pred_check
        %p284 = pneg %p147
      $region30: #{inceptionv1_forward.1} parent=11 // pred_check_branch
        %286 = sbr.rel (%p284) target = $region32
      $region31: #{inceptionv1_forward.1} parent=11 // pred_region
        _
      $region32: #{inceptionv1_forward.1} parent=11 // pred_fallthru
        _
      // Predicated region
      $region33: #{inceptionv1_forward.1} parent=11 // pred_check
        %p287 = pneg %p168
      $region34: #{inceptionv1_forward.1} parent=11 // pred_check_branch
        %289 = sbr.rel (%p287) target = $region36
      $region35: #{inceptionv1_forward.1} parent=11 // pred_region
        _
      $region36: #{inceptionv1_forward.1} parent=11 // pred_fallthru
        _
      // Predicated region
      $region37: #{inceptionv1_forward.1} parent=11 // pred_check
        %p290 = pneg %p189
      $region38: #{inceptionv1_forward.1} parent=11 // pred_check_branch
        %292 = sbr.rel (%p290) target = $region40
      $region39: #{inceptionv1_forward.1} parent=11 // pred_region
        _
      $region40: #{inceptionv1_forward.1} parent=11 // pred_fallthru
        _
      // Predicated region
      $region41: #{inceptionv1_forward.1} parent=11 // pred_check
        %p293 = pneg %p210
      $region42: #{inceptionv1_forward.1} parent=11 // pred_check_branch
        %295 = sbr.rel (%p293) target = $region44
      $region43: #{inceptionv1_forward.1} parent=11 // pred_region
        _
      $region44: #{inceptionv1_forward.1} parent=11 // pred_fallthru
        _
      // Predicated region
      $region45: #{inceptionv1_forward.1} parent=11 // pred_check
        %p296 = pneg %p231
      $region46: #{inceptionv1_forward.1} parent=11 // pred_check_branch
        %298 = sbr.rel (%p296) target = $region48
      $region47: #{inceptionv1_forward.1} parent=11 // pred_region
        _
      $region48: #{inceptionv1_forward.1} parent=11 // pred_fallthru
        _
    $region12: #{inceptionv1_forward.1} parent=5 // pred_fallthru
      _
    %p299 = scmp.lt.s32.totalorder %s16, 2
    // Predicated region
    $region49: #{inceptionv1_forward.1} parent=5 // pred_check
      %p300 = pneg %p299
    $region50: #{inceptionv1_forward.1} parent=5 // pred_check_branch
      %302 = sbr.rel (%p300) target = $region52
    $region51: #{inceptionv1_forward.1} parent=5 // pred_region
      // Predicated region
      $region53: #{inceptionv1_forward.1} parent=51 // pred_check
        %p303 = pneg %p36
      $region54: #{inceptionv1_forward.1} parent=51 // pred_check_branch
        %305 = sbr.rel (%p303) target = $region56
      $region55: #{inceptionv1_forward.1} parent=51 // pred_region
        %p306 = scmp.lt.s32.totalorder %s16, 1
        %s307 = scalar_select %p306, %s16, 1
        %s308 = smul.addr %s307, 2
        %s309 = smul.addr %s308, 4
        %s310 = scalar_lea.vmem %s0, %s309
      $region56: #{inceptionv1_forward.1} parent=51 // pred_fallthru
        _
    $region52: #{inceptionv1_forward.1} parent=5 // pred_fallthru
      _
    %p311 = scmp.le.s32.totalorder 1, %s16
    %p312 = scmp.lt.s32.totalorder %s16, 3
    %p313 = pnand %p311, %p312
    %p314 = pneg %p313
    // Predicated region
    $region57: #{inceptionv1_forward.1} parent=5 // pred_check
      _
    $region58: #{inceptionv1_forward.1} parent=5 // pred_check_branch
      %316 = sbr.rel (%p313) target = $region60
    $region59: #{inceptionv1_forward.1} parent=5 // pred_region
      %s317 = ssub.s32 %s16, 1
      %p318 = scmp.lt.s32.totalorder %s21, 1
      %s319 = scalar_select %p318, %s21, 1
      %s320 = smul.addr %s319, 2
      %s321 = smul.addr %s320, 4
      %s322 = scalar_lea.vmem %s0, %s321
      %p323 = pneg %p42
      %p324 = pneg %p39
      %p325 = pneg %p63
      %p326 = pneg %p60
      %p327 = pneg %p84
      %p328 = pneg %p81
      %p329 = pneg %p105
      %p330 = pneg %p102
      %p331 = pneg %p126
      %p332 = pneg %p123
      %p333 = pneg %p147
      %p334 = pneg %p144
      %p335 = pneg %p168
      %p336 = pneg %p165
      %p337 = pneg %p189
      %p338 = pneg %p186
      %p339 = pneg %p210
      %p340 = pneg %p207
      %p341 = pneg %p231
      %p342 = pneg %p228
      %p343 = pneg %p257
      %p344 = pneg %p254
      %p345 = scmp.lt.s32.totalorder %s21, 1
      %s346 = scalar_select %p345, %s21, 1
      %s347 = smul.addr %s346, 8
      %s348 = smul.addr %s347, 8
      %s349 = scalar_lea.vmem %s10, %s348
      %p350 = scmp.lt.s32.totalorder %s21, 1
      %s351 = scalar_select %p350, %s21, 1
      %s352 = smul.addr %s351, 2
      %s353 = smul.addr %s352, 4
      %s354 = scalar_lea.vmem %s0, %s353
      %p355 = scmp.lt.s32.totalorder %s21, 1
      %s356 = scalar_select %p355, %s21, 1
      %s357 = smul.addr %s356, 8
      %s358 = smul.addr %s357, 8
      %s359 = scalar_lea.vmem %s10, %s358
      %v361 = vld [vmem:[%s1] ss:$2 sm:$0x3]
      %s362 = scalar_lea.vmem %s1, 1
      %v363 = vld [vmem:[%s362] ss:$2 sm:$0x3]
      %v364 = vld [vmem:[%s354] sm:$0xff]
      %v366 = vcombine.high %v364, %v364
      %v368 = vpack.c.bf16 %v364, %v364
      %v369 = vpack.c.bf16 %v366, %v366
      %v370 = vld [vmem:[%s2] sm:$0xf]
      %v371 = vld [vmem:[%s2 + $0x4] sm:$0xf]
      %v372 = vld [vmem:[%s3] sm:$0xff]
      %v373 = vld [vmem:[%s3 + $0x8] sm:$0xff]
      %375 = vset.pattern.permute.xlu0 0
      %376 = vperm.xlu0 %375, %v372
      %v377 = vpop.permute.xlu0 %376
      %380 = vset.pattern.permute.xlu0 0
      %381 = vperm.xlu0 %380, %v373
      %v382 = vpop.permute.xlu0 %381
      %v386 = vunpack.c.l.b16 %v370
      %v387 = vunpack.c.l.b16 %v371
      %v388 = vpack.c.b16 %v387, %v386
      %vm389 = vcmask 31744
      %v391 = vsel %vm389, %v388, 0
      %vm393 = vcmask 1041408
      %v395 = vsel %vm393, %v368, 0
      %v398 = vsel %vm393, %v369, 0
      %400 = vmatprep.subr.bf16.mxu0 %v398
      %401 = vmatpush1.bf16.msra.mxu0 %v395
      %402 = vmatprep.subr.bf16.mxu0 0
      %403 = vmatpush1.bf16.msra.mxu0 0
      %404 = vmatprep.subr.bf16.mxu0 0
      %405 = vmatpush1.bf16.msra.mxu0 0
      %406 = vmatprep.subr.bf16.mxu0 0
      %407 = vmatpush1.bf16.msra.mxu0 0
      %408 = vmatprep.subr.bf16.mxu0 0
      %409 = vmatpush1.bf16.msra.mxu0 0
      %410 = vmatprep.subr.bf16.mxu0 0
      %411 = vmatpush1.bf16.msra.mxu0 0
      %412 = vmatprep.subr.bf16.mxu0 0
      %413 = vmatpush1.bf16.msra.mxu0 0
      %414 = vmatprep.subr.bf16.mxu0 0
      %415 = vmatpush1.bf16.msra.mxu0 0
      %416 = vmatprep.subr.bf16.mxu0 0
      %417 = vmatpush1.bf16.msra.mxu0 0
      %418 = vmatprep.subr.bf16.mxu0 0
      %419 = vmatpush1.bf16.msra.mxu0 0
      %420 = vmatprep.subr.bf16.mxu0 0
      %421 = vmatpush1.bf16.msra.mxu0 0
      %422 = vmatprep.subr.bf16.mxu0 0
      %423 = vmatpush1.bf16.msra.mxu0 0
      %424 = vmatprep.subr.bf16.mxu0 0
      %425 = vmatpush1.bf16.msra.mxu0 0
      %426 = vmatprep.subr.bf16.mxu0 0
      %427 = vmatpush1.bf16.msra.mxu0 0
      %428 = vmatprep.subr.bf16.mxu0 0
      %429 = vmatpush1.bf16.msra.mxu0 0
      %430 = vmatprep.subr.bf16.mxu0 0
      %431 = vmatpush1.bf16.msra.mxu0 0
      %432 = vmatprep.mubr.bf16.mxu0 0
      %433 = vmatmul.mubr.bf16.gmra.mrb[0].mxu0 %v391
      %v434 = vpop.f32.mrb[0].mxu0
      %v435 = vadd.f32 %v377, %v434
      %v436 = vpop.f32.mrb[0].mxu0
      %v437 = vadd.f32 %v377, %v436
      %v438 = vpop.f32.mrb[0].mxu0
      %v439 = vadd.f32 %v382, %v438
      %v440 = vpop.f32.mrb[0].mxu0
      %v441 = vadd.f32 %v382, %v440
      %442 = vdwg.mxu0
      %v443 = vmax.f32 %v435, 0.0
      %v444 = vmax.f32 %v437, 0.0
      %v445 = vmax.f32 %v439, 0.0
      %v446 = vmax.f32 %v441, 0.0
      %447 = vst [vmem:[%s359] sm:$0xff] %v443
      %448 = vst [vmem:[%s359 + $0x8] sm:$0xff] %v444
      %449 = vrot.lane.b32.xlu0 %v445, 17
      %v450 = vpop.permute.xlu0 %449
      %451 = vrot.lane.b32.xlu0 %v446, 17
      %v452 = vpop.permute.xlu0 %451
      %v453 = vlaneseq
      %v454 = vand.u32 %v453, 127
      %vm455 = vcmp.lt.s32.totalorder %v454, 17
      %v456 = vsel %vm455, %v450, %v452
      %v457 = vsel %vm455, %v452, %v450
      %vm458 = vcmp.ge.s32.totalorder %v361, 1
      %vm459 = vcmp.ge.s32.totalorder %v363, 1
      %vm460 = vmand %vm458, %vm459
      %v461 = vsel %vm460, 1, 0
      %v462 = vlaneseq
      %v463 = vshrl.u32 %v462, 7
      %v464 = vsub.s32 0, %v463
      %v465 = vrot.slane %v461, %v464
      %v466 = vlaneseq
      %v467 = vshrl.u32 %v466, 7
      %v468 = vsub.s32 1, %v467
      %v469 = vrot.slane %v461, %v468
      %vm470 = vcmp.eq.s32.totalorder %v465, 1
      %vm471 = vcmp.eq.s32.totalorder %v469, 1
      %v472 = vsel %vm470, %v457, 0.0
      %v473 = vsel %vm471, %v456, 0.0
      %474 = vrot.lane.b32.xlu0 %v445, 16
      %v475 = vpop.permute.xlu0 %474
      %476 = vrot.lane.b32.xlu0 %v446, 16
      %v477 = vpop.permute.xlu0 %476
      %vm478 = vcmp.lt.s32.totalorder %v454, 16
      %v479 = vsel %vm478, %v475, %v477
      %v480 = vsel %vm478, %v477, %v475
      %v481 = vsel %vm458, 1, 0
      %v482 = vlaneseq
      %v483 = vshrl.u32 %v482, 7
      %v484 = vsub.s32 0, %v483
      %v485 = vrot.slane %v481, %v484
      %v486 = vlaneseq
      %v487 = vshrl.u32 %v486, 7
      %v488 = vsub.s32 1, %v487
      %v489 = vrot.slane %v481, %v488
      %vm490 = vcmp.eq.s32.totalorder %v485, 1
      %vm491 = vcmp.eq.s32.totalorder %v489, 1
      %v492 = vsel %vm490, %v480, 0.0
      %v493 = vsel %vm491, %v479, 0.0
      %494 = vrot.lane.b32.xlu0 %v445, 15
      %v495 = vpop.permute.xlu0 %494
      %496 = vrot.lane.b32.xlu0 %v446, 15
      %v497 = vpop.permute.xlu0 %496
      %vm498 = vcmp.lt.s32.totalorder %v454, 15
      %v499 = vsel %vm498, %v495, %v497
      %v500 = vsel %vm498, %v497, %v495
      %vm501 = vcmp.lt.s32.totalorder %v363, 15
      %vm502 = vmand %vm458, %vm501
      %v503 = vsel %vm502, 1, 0
      %v504 = vlaneseq
      %v505 = vshrl.u32 %v504, 7
      %v506 = vsub.s32 0, %v505
      %v507 = vrot.slane %v503, %v506
      %v508 = vlaneseq
      %v509 = vshrl.u32 %v508, 7
      %v510 = vsub.s32 1, %v509
      %v511 = vrot.slane %v503, %v510
      %vm512 = vcmp.eq.s32.totalorder %v507, 1
      %vm513 = vcmp.eq.s32.totalorder %v511, 1
      %v514 = vsel %vm512, %v500, 0.0
      %v515 = vsel %vm513, %v499, 0.0
      %516 = vrot.lane.b32.xlu0 %v445, 1
      %v517 = vpop.permute.xlu0 %516
      %518 = vrot.lane.b32.xlu0 %v446, 1
      %v519 = vpop.permute.xlu0 %518
      %vm520 = vcmp.lt.s32.totalorder %v454, 1
      %v521 = vsel %vm520, %v517, %v519
      %v522 = vsel %vm520, %v519, %v517
      %v523 = vsel %vm459, 1, 0
      %v524 = vlaneseq
      %v525 = vshrl.u32 %v524, 7
      %v526 = vsub.s32 0, %v525
      %v527 = vrot.slane %v523, %v526
      %v528 = vlaneseq
      %v529 = vshrl.u32 %v528, 7
      %v530 = vsub.s32 1, %v529
      %v531 = vrot.slane %v523, %v530
      %vm532 = vcmp.eq.s32.totalorder %v527, 1
      %vm533 = vcmp.eq.s32.totalorder %v531, 1
      %v534 = vsel %vm532, %v522, 0.0
      %v535 = vsel %vm533, %v521, 0.0
      %536 = vrot.lane.b32.xlu0 %v445, 127
      %v537 = vpop.permute.xlu0 %536
      %538 = vrot.lane.b32.xlu0 %v446, 127
      %v539 = vpop.permute.xlu0 %538
      %vm540 = vcmp.lt.s32.totalorder %v454, 127
      %v541 = vsel %vm540, %v537, %v539
      %v542 = vsel %vm540, %v539, %v537
      %v543 = vsel %vm501, 1, 0
      %v544 = vlaneseq
      %v545 = vshrl.u32 %v544, 7
      %v546 = vsub.s32 0, %v545
      %v547 = vrot.slane %v543, %v546
      %v548 = vlaneseq
      %v549 = vshrl.u32 %v548, 7
      %v550 = vsub.s32 1, %v549
      %v551 = vrot.slane %v543, %v550
      %vm552 = vcmp.eq.s32.totalorder %v547, 1
      %vm553 = vcmp.eq.s32.totalorder %v551, 1
      %v554 = vsel %vm552, %v541, 0.0
      %v555 = vsel %vm553, %v542, 0.0
      %556 = vrot.lane.b32.xlu0 %v445, 113
      %v557 = vpop.permute.xlu0 %556
      %558 = vrot.lane.b32.xlu0 %v446, 113
      %v559 = vpop.permute.xlu0 %558
      %vm560 = vcmp.lt.s32.totalorder %v454, 113
      %v561 = vsel %vm560, %v557, %v559
      %v562 = vsel %vm560, %v559, %v557
      %vm563 = vcmp.lt.s32.totalorder %v361, 15
      %vm564 = vmand %vm563, %vm459
      %v565 = vsel %vm564, 1, 0
      %v566 = vlaneseq
      %v567 = vshrl.u32 %v566, 7
      %v568 = vsub.s32 0, %v567
      %v569 = vrot.slane %v565, %v568
      %v570 = vlaneseq
      %v571 = vshrl.u32 %v570, 7
      %v572 = vsub.s32 1, %v571
      %v573 = vrot.slane %v565, %v572
      %vm574 = vcmp.eq.s32.totalorder %v569, 1
      %vm575 = vcmp.eq.s32.totalorder %v573, 1
      %v576 = vsel %vm574, %v561, 0.0
      %v577 = vsel %vm575, %v562, 0.0
      %578 = vrot.lane.b32.xlu0 %v445, 112
      %v579 = vpop.permute.xlu0 %578
      %580 = vrot.lane.b32.xlu0 %v446, 112
      %v581 = vpop.permute.xlu0 %580
      %vm582 = vcmp.lt.s32.totalorder %v454, 112
      %v583 = vsel %vm582, %v579, %v581
      %v584 = vsel %vm582, %v581, %v579
      %v585 = vsel %vm563, 1, 0
      %v586 = vlaneseq
      %v587 = vshrl.u32 %v586, 7
      %v588 = vsub.s32 0, %v587
      %v589 = vrot.slane %v585, %v588
      %v590 = vlaneseq
      %v591 = vshrl.u32 %v590, 7
      %v592 = vsub.s32 1, %v591
      %v593 = vrot.slane %v585, %v592
      %vm594 = vcmp.eq.s32.totalorder %v589, 1
      %vm595 = vcmp.eq.s32.totalorder %v593, 1
      %v596 = vsel %vm594, %v583, 0.0
      %v597 = vsel %vm595, %v584, 0.0
      %598 = vrot.lane.b32.xlu0 %v445, 111
      %v599 = vpop.permute.xlu0 %598
      %600 = vrot.lane.b32.xlu0 %v446, 111
      %v601 = vpop.permute.xlu0 %600
      %vm602 = vcmp.lt.s32.totalorder %v454, 111
      %v603 = vsel %vm602, %v599, %v601
      %v604 = vsel %vm602, %v601, %v599
      %vm605 = vmand %vm563, %vm501
      %v606 = vsel %vm605, 1, 0
      %v607 = vlaneseq
      %v608 = vshrl.u32 %v607, 7
      %v609 = vsub.s32 0, %v608
      %v610 = vrot.slane %v606, %v609
      %v611 = vlaneseq
      %v612 = vshrl.u32 %v611, 7
      %v613 = vsub.s32 1, %v612
      %v614 = vrot.slane %v606, %v613
      %vm615 = vcmp.eq.s32.totalorder %v610, 1
      %vm616 = vcmp.eq.s32.totalorder %v614, 1
      %v617 = vsel %vm615, %v603, 0.0
      %v618 = vsel %vm616, %v604, 0.0
      %v621 = vrot.slane %v492, 4
      %v622 = vrot.slane %v493, 4
      %v627 = vrot.slane %v534, 4
      %v628 = vrot.slane %v535, 4
      %v633 = vrot.slane %v554, 4
      %v634 = vrot.slane %v555, 4
      %v639 = vrot.slane %v596, 4
      %v640 = vrot.slane %v597, 4
      %vm643 = vcmask 1043456
      %v644 = vsel %vm643, %v472, %v621
      %v645 = vsel %vm643, %v473, %v622
      %v646 = vsel %vm643, %v514, %v627
      %v647 = vsel %vm643, %v515, %v628
      %v648 = vsel %vm643, %v445, %v633
      %v649 = vsel %vm643, %v446, %v634
      %v650 = vsel %vm643, %v576, %v639
      %v651 = vsel %vm643, %v577, %v640
      %v652 = vpack.c.bf16 %v646, %v644
      %v653 = vpack.c.bf16 %v647, %v645
      %v654 = vpack.c.bf16 %v650, %v648
      %v655 = vpack.c.bf16 %v651, %v649
      %v656 = vpack.c.bf16 %v617, %v617
      %v657 = vpack.c.bf16 %v618, %v618
      %v658 = vld [vmem:[%s4] sm:$0xf]
      %v659 = vld [vmem:[%s5] sm:$0xff]
      %661 = vset.pattern.permute.xlu0 0
      %662 = vperm.xlu0 %661, %v659
      %v663 = vpop.permute.xlu0 %662
      %vm665 = vcmask 293888
      %v667 = vsel %vm665, %v658, 0
      %v670 = vsel %vm393, %v656, 0
      %v673 = vsel %vm393, %v657, 0
      %675 = vmatprep.subr.bf16.mxu0 %v653
      %676 = vmatpush1.bf16.msra.mxu0 %v652
      %677 = vmatprep.subr.bf16.mxu0 %v655
      %678 = vmatpush1.bf16.msra.mxu0 %v654
      %679 = vmatprep.subr.bf16.mxu0 %v673
      %680 = vmatpush1.bf16.msra.mxu0 %v670
      %681 = vmatprep.subr.bf16.mxu0 0
      %682 = vmatpush1.bf16.msra.mxu0 0
      %683 = vmatprep.subr.bf16.mxu0 0
      %684 = vmatpush1.bf16.msra.mxu0 0
      %685 = vmatprep.subr.bf16.mxu0 0
      %686 = vmatpush1.bf16.msra.mxu0 0
      %687 = vmatprep.subr.bf16.mxu0 0
      %688 = vmatpush1.bf16.msra.mxu0 0
      %689 = vmatprep.subr.bf16.mxu0 0
      %690 = vmatpush1.bf16.msra.mxu0 0
      %691 = vmatprep.subr.bf16.mxu0 0
      %692 = vmatpush1.bf16.msra.mxu0 0
      %693 = vmatprep.subr.bf16.mxu0 0
      %694 = vmatpush1.bf16.msra.mxu0 0
      %695 = vmatprep.subr.bf16.mxu0 0
      %696 = vmatpush1.bf16.msra.mxu0 0
      %697 = vmatprep.subr.bf16.mxu0 0
      %698 = vmatpush1.bf16.msra.mxu0 0
      %699 = vmatprep.subr.bf16.mxu0 0
      %700 = vmatpush1.bf16.msra.mxu0 0
      %701 = vmatprep.subr.bf16.mxu0 0
      %702 = vmatpush1.bf16.msra.mxu0 0
      %703 = vmatprep.subr.bf16.mxu0 0
      %704 = vmatpush1.bf16.msra.mxu0 0
      %705 = vmatprep.subr.bf16.mxu0 0
      %706 = vmatpush1.bf16.msra.mxu0 0
      %707 = vmatprep.mubr.bf16.mxu0 0
      %708 = vmatmul.mubr.bf16.gmra.mrb[0].mxu0 %v667
      %v709 = vpop.f32.mrb[0].mxu0
      %v710 = vadd.f32 %v663, %v709
      %v711 = vpop.f32.mrb[0].mxu0
      %v712 = vadd.f32 %v663, %v711
      %v713 = vpop.f32.mrb[0].mxu0
      %v714 = vpop.f32.mrb[0].mxu0
      %715 = vdwg.mxu0
      %v716 = vmax.f32 %v710, 0.0
      %v717 = vmax.f32 %v712, 0.0
      %718 = vst [vmem:[%s359 + $0x10] sm:$0xff] %v716
      %719 = vst [vmem:[%s359 + $0x18] sm:$0xff] %v717
      %v722 = vrot.slane %v445, 4
      %v723 = vrot.slane %v446, 4
      %726 = vrot.lane.b32.xlu0 %v722, 34
      %v727 = vpop.permute.xlu0 %726
      %728 = vrot.lane.b32.xlu0 %v723, 34
      %v729 = vpop.permute.xlu0 %728
      %vm730 = vcmp.lt.s32.totalorder %v454, 34
      %v731 = vsel %vm730, %v727, %v729
      %v732 = vsel %vm730, %v729, %v727
      %vm733 = vcmp.ge.s32.totalorder %v361, 2
      %vm734 = vcmp.ge.s32.totalorder %v363, 2
      %vm735 = vmand %vm733, %vm734
      %v736 = vsel %vm735, 1, 0
      %v737 = vlaneseq
      %v738 = vshrl.u32 %v737, 7
      %v739 = vsub.s32 0, %v738
      %v740 = vrot.slane %v736, %v739
      %v741 = vlaneseq
      %v742 = vshrl.u32 %v741, 7
      %v743 = vsub.s32 1, %v742
      %v744 = vrot.slane %v736, %v743
      %vm745 = vcmp.eq.s32.totalorder %v740, 1
      %vm746 = vcmp.eq.s32.totalorder %v744, 1
      %v747 = vsel %vm745, %v732, 0.0
      %v748 = vsel %vm746, %v731, 0.0
      %749 = vrot.lane.b32.xlu0 %v722, 33
      %v750 = vpop.permute.xlu0 %749
      %751 = vrot.lane.b32.xlu0 %v723, 33
      %v752 = vpop.permute.xlu0 %751
      %vm753 = vcmp.lt.s32.totalorder %v454, 33
      %v754 = vsel %vm753, %v750, %v752
      %v755 = vsel %vm753, %v752, %v750
      %vm756 = vmand %vm733, %vm459
      %v757 = vsel %vm756, 1, 0
      %v758 = vlaneseq
      %v759 = vshrl.u32 %v758, 7
      %v760 = vsub.s32 0, %v759
      %v761 = vrot.slane %v757, %v760
      %v762 = vlaneseq
      %v763 = vshrl.u32 %v762, 7
      %v764 = vsub.s32 1, %v763
      %v765 = vrot.slane %v757, %v764
      %vm766 = vcmp.eq.s32.totalorder %v761, 1
      %vm767 = vcmp.eq.s32.totalorder %v765, 1
      %v768 = vsel %vm766, %v755, 0.0
      %v769 = vsel %vm767, %v754, 0.0
      %770 = vrot.lane.b32.xlu0 %v722, 32
      %v771 = vpop.permute.xlu0 %770
      %772 = vrot.lane.b32.xlu0 %v723, 32
      %v773 = vpop.permute.xlu0 %772
      %vm774 = vcmp.lt.s32.totalorder %v454, 32
      %v775 = vsel %vm774, %v771, %v773
      %v776 = vsel %vm774, %v773, %v771
      %v777 = vsel %vm733, 1, 0
      %v778 = vlaneseq
      %v779 = vshrl.u32 %v778, 7
      %v780 = vsub.s32 0, %v779
      %v781 = vrot.slane %v777, %v780
      %v782 = vlaneseq
      %v783 = vshrl.u32 %v782, 7
      %v784 = vsub.s32 1, %v783
      %v785 = vrot.slane %v777, %v784
      %vm786 = vcmp.eq.s32.totalorder %v781, 1
      %vm787 = vcmp.eq.s32.totalorder %v785, 1
      %v788 = vsel %vm786, %v776, 0.0
      %v789 = vsel %vm787, %v775, 0.0
      %790 = vrot.lane.b32.xlu0 %v722, 31
      %v791 = vpop.permute.xlu0 %790
      %792 = vrot.lane.b32.xlu0 %v723, 31
      %v793 = vpop.permute.xlu0 %792
      %vm794 = vcmp.lt.s32.totalorder %v454, 31
      %v795 = vsel %vm794, %v791, %v793
      %v796 = vsel %vm794, %v793, %v791
      %vm797 = vmand %vm733, %vm501
      %v798 = vsel %vm797, 1, 0
      %v799 = vlaneseq
      %v800 = vshrl.u32 %v799, 7
      %v801 = vsub.s32 0, %v800
      %v802 = vrot.slane %v798, %v801
      %v803 = vlaneseq
      %v804 = vshrl.u32 %v803, 7
      %v805 = vsub.s32 1, %v804
      %v806 = vrot.slane %v798, %v805
      %vm807 = vcmp.eq.s32.totalorder %v802, 1
      %vm808 = vcmp.eq.s32.totalorder %v806, 1
      %v809 = vsel %vm807, %v796, 0.0
      %v810 = vsel %vm808, %v795, 0.0
      %811 = vrot.lane.b32.xlu0 %v722, 30
      %v812 = vpop.permute.xlu0 %811
      %813 = vrot.lane.b32.xlu0 %v723, 30
      %v814 = vpop.permute.xlu0 %813
      %vm815 = vcmp.lt.s32.totalorder %v454, 30
      %v816 = vsel %vm815, %v812, %v814
      %v817 = vsel %vm815, %v814, %v812
      %vm818 = vcmp.lt.s32.totalorder %v363, 14
      %vm819 = vmand %vm733, %vm818
      %v820 = vsel %vm819, 1, 0
      %v821 = vlaneseq
      %v822 = vshrl.u32 %v821, 7
      %v823 = vsub.s32 0, %v822
      %v824 = vrot.slane %v820, %v823
      %v825 = vlaneseq
      %v826 = vshrl.u32 %v825, 7
      %v827 = vsub.s32 1, %v826
      %v828 = vrot.slane %v820, %v827
      %vm829 = vcmp.eq.s32.totalorder %v824, 1
      %vm830 = vcmp.eq.s32.totalorder %v828, 1
      %v831 = vsel %vm829, %v817, 0.0
      %v832 = vsel %vm830, %v816, 0.0
      %833 = vrot.lane.b32.xlu0 %v722, 18
      %v834 = vpop.permute.xlu0 %833
      %835 = vrot.lane.b32.xlu0 %v723, 18
      %v836 = vpop.permute.xlu0 %835
      %vm837 = vcmp.lt.s32.totalorder %v454, 18
      %v838 = vsel %vm837, %v834, %v836
      %v839 = vsel %vm837, %v836, %v834
      %vm840 = vmand %vm458, %vm734
      %v841 = vsel %vm840, 1, 0
      %v842 = vlaneseq
      %v843 = vshrl.u32 %v842, 7
      %v844 = vsub.s32 0, %v843
      %v845 = vrot.slane %v841, %v844
      %v846 = vlaneseq
      %v847 = vshrl.u32 %v846, 7
      %v848 = vsub.s32 1, %v847
      %v849 = vrot.slane %v841, %v848
      %vm850 = vcmp.eq.s32.totalorder %v845, 1
      %vm851 = vcmp.eq.s32.totalorder %v849, 1
      %v852 = vsel %vm850, %v839, 0.0
      %v853 = vsel %vm851, %v838, 0.0
      %854 = vrot.lane.b32.xlu0 %v722, 17
      %v855 = vpop.permute.xlu0 %854
      %856 = vrot.lane.b32.xlu0 %v723, 17
      %v857 = vpop.permute.xlu0 %856
      %v858 = vsel %vm455, %v855, %v857
      %v859 = vsel %vm455, %v857, %v855
      %v860 = vsel %vm470, %v859, 0.0
      %v861 = vsel %vm471, %v858, 0.0
      %862 = vrot.lane.b32.xlu0 %v722, 16
      %v863 = vpop.permute.xlu0 %862
      %864 = vrot.lane.b32.xlu0 %v723, 16
      %v865 = vpop.permute.xlu0 %864
      %v866 = vsel %vm478, %v863, %v865
      %v867 = vsel %vm478, %v865, %v863
      %v868 = vsel %vm490, %v867, 0.0
      %v869 = vsel %vm491, %v866, 0.0
      %870 = vrot.lane.b32.xlu0 %v722, 15
      %v871 = vpop.permute.xlu0 %870
      %872 = vrot.lane.b32.xlu0 %v723, 15
      %v873 = vpop.permute.xlu0 %872
      %v874 = vsel %vm498, %v871, %v873
      %v875 = vsel %vm498, %v873, %v871
      %v876 = vsel %vm512, %v875, 0.0
      %v877 = vsel %vm513, %v874, 0.0
      %878 = vrot.lane.b32.xlu0 %v722, 14
      %v879 = vpop.permute.xlu0 %878
      %880 = vrot.lane.b32.xlu0 %v723, 14
      %v881 = vpop.permute.xlu0 %880
      %vm882 = vcmp.lt.s32.totalorder %v454, 14
      %v883 = vsel %vm882, %v879, %v881
      %v884 = vsel %vm882, %v881, %v879
      %vm885 = vmand %vm458, %vm818
      %v886 = vsel %vm885, 1, 0
      %v887 = vlaneseq
      %v888 = vshrl.u32 %v887, 7
      %v889 = vsub.s32 0, %v888
      %v890 = vrot.slane %v886, %v889
      %v891 = vlaneseq
      %v892 = vshrl.u32 %v891, 7
      %v893 = vsub.s32 1, %v892
      %v894 = vrot.slane %v886, %v893
      %vm895 = vcmp.eq.s32.totalorder %v890, 1
      %vm896 = vcmp.eq.s32.totalorder %v894, 1
      %v897 = vsel %vm895, %v884, 0.0
      %v898 = vsel %vm896, %v883, 0.0
      %899 = vrot.lane.b32.xlu0 %v722, 2
      %v900 = vpop.permute.xlu0 %899
      %901 = vrot.lane.b32.xlu0 %v723, 2
      %v902 = vpop.permute.xlu0 %901
      %vm903 = vcmp.lt.s32.totalorder %v454, 2
      %v904 = vsel %vm903, %v900, %v902
      %v905 = vsel %vm903, %v902, %v900
      %v906 = vsel %vm734, 1, 0
      %v907 = vlaneseq
      %v908 = vshrl.u32 %v907, 7
      %v909 = vsub.s32 0, %v908
      %v910 = vrot.slane %v906, %v909
      %v911 = vlaneseq
      %v912 = vshrl.u32 %v911, 7
      %v913 = vsub.s32 1, %v912
      %v914 = vrot.slane %v906, %v913
      %vm915 = vcmp.eq.s32.totalorder %v910, 1
      %vm916 = vcmp.eq.s32.totalorder %v914, 1
      %v917 = vsel %vm915, %v905, 0.0
      %v918 = vsel %vm916, %v904, 0.0
      %919 = vrot.lane.b32.xlu0 %v722, 1
      %v920 = vpop.permute.xlu0 %919
      %921 = vrot.lane.b32.xlu0 %v723, 1
      %v922 = vpop.permute.xlu0 %921
      %v923 = vsel %vm520, %v920, %v922
      %v924 = vsel %vm520, %v922, %v920
      %v925 = vsel %vm532, %v924, 0.0
      %v926 = vsel %vm533, %v923, 0.0
      %927 = vrot.lane.b32.xlu0 %v722, 127
      %v928 = vpop.permute.xlu0 %927
      %929 = vrot.lane.b32.xlu0 %v723, 127
      %v930 = vpop.permute.xlu0 %929
      %v931 = vsel %vm540, %v928, %v930
      %v932 = vsel %vm540, %v930, %v928
      %v933 = vsel %vm552, %v931, 0.0
      %v934 = vsel %vm553, %v932, 0.0
      %935 = vrot.lane.b32.xlu0 %v722, 126
      %v936 = vpop.permute.xlu0 %935
      %937 = vrot.lane.b32.xlu0 %v723, 126
      %v938 = vpop.permute.xlu0 %937
      %vm939 = vcmp.lt.s32.totalorder %v454, 126
      %v940 = vsel %vm939, %v936, %v938
      %v941 = vsel %vm939, %v938, %v936
      %v942 = vsel %vm818, 1, 0
      %v943 = vlaneseq
      %v944 = vshrl.u32 %v943, 7
      %v945 = vsub.s32 0, %v944
      %v946 = vrot.slane %v942, %v945
      %v947 = vlaneseq
      %v948 = vshrl.u32 %v947, 7
      %v949 = vsub.s32 1, %v948
      %v950 = vrot.slane %v942, %v949
      %vm951 = vcmp.eq.s32.totalorder %v946, 1
      %vm952 = vcmp.eq.s32.totalorder %v950, 1
      %v953 = vsel %vm951, %v940, 0.0
      %v954 = vsel %vm952, %v941, 0.0
      %955 = vrot.lane.b32.xlu0 %v722, 114
      %v956 = vpop.permute.xlu0 %955
      %957 = vrot.lane.b32.xlu0 %v723, 114
      %v958 = vpop.permute.xlu0 %957
      %vm959 = vcmp.lt.s32.totalorder %v454, 114
      %v960 = vsel %vm959, %v956, %v958
      %v961 = vsel %vm959, %v958, %v956
      %vm962 = vmand %vm563, %vm734
      %v963 = vsel %vm962, 1, 0
      %v964 = vlaneseq
      %v965 = vshrl.u32 %v964, 7
      %v966 = vsub.s32 0, %v965
      %v967 = vrot.slane %v963, %v966
      %v968 = vlaneseq
      %v969 = vshrl.u32 %v968, 7
      %v970 = vsub.s32 1, %v969
      %v971 = vrot.slane %v963, %v970
      %vm972 = vcmp.eq.s32.totalorder %v967, 1
      %vm973 = vcmp.eq.s32.totalorder %v971, 1
      %v974 = vsel %vm972, %v960, 0.0
      %v975 = vsel %vm973, %v961, 0.0
      %976 = vrot.lane.b32.xlu0 %v722, 113
      %v977 = vpop.permute.xlu0 %976
      %978 = vrot.lane.b32.xlu0 %v723, 113
      %v979 = vpop.permute.xlu0 %978
      %v980 = vsel %vm560, %v977, %v979
      %v981 = vsel %vm560, %v979, %v977
      %v982 = vsel %vm574, %v980, 0.0
      %v983 = vsel %vm575, %v981, 0.0
      %984 = vrot.lane.b32.xlu0 %v722, 112
      %v985 = vpop.permute.xlu0 %984
      %986 = vrot.lane.b32.xlu0 %v723, 112
      %v987 = vpop.permute.xlu0 %986
      %v988 = vsel %vm582, %v985, %v987
      %v989 = vsel %vm582, %v987, %v985
      %v990 = vsel %vm594, %v988, 0.0
      %v991 = vsel %vm595, %v989, 0.0
      %992 = vrot.lane.b32.xlu0 %v722, 111
      %v993 = vpop.permute.xlu0 %992
      %994 = vrot.lane.b32.xlu0 %v723, 111
      %v995 = vpop.permute.xlu0 %994
      %v996 = vsel %vm602, %v993, %v995
      %v997 = vsel %vm602, %v995, %v993
      %v998 = vsel %vm615, %v996, 0.0
      %v999 = vsel %vm616, %v997, 0.0
      %1000 = vrot.lane.b32.xlu0 %v722, 110
      %v1001 = vpop.permute.xlu0 %1000
      %1002 = vrot.lane.b32.xlu0 %v723, 110
      %v1003 = vpop.permute.xlu0 %1002
      %vm1004 = vcmp.lt.s32.totalorder %v454, 110
      %v1005 = vsel %vm1004, %v1001, %v1003
      %v1006 = vsel %vm1004, %v1003, %v1001
      %vm1007 = vmand %vm563, %vm818
      %v1008 = vsel %vm1007, 1, 0
      %v1009 = vlaneseq
      %v1010 = vshrl.u32 %v1009, 7
      %v1011 = vsub.s32 0, %v1010
      %v1012 = vrot.slane %v1008, %v1011
      %v1013 = vlaneseq
      %v1014 = vshrl.u32 %v1013, 7
      %v1015 = vsub.s32 1, %v1014
      %v1016 = vrot.slane %v1008, %v1015
      %vm1017 = vcmp.eq.s32.totalorder %v1012, 1
      %vm1018 = vcmp.eq.s32.totalorder %v1016, 1
      %v1019 = vsel %vm1017, %v1005, 0.0
      %v1020 = vsel %vm1018, %v1006, 0.0
      %1021 = vrot.lane.b32.xlu0 %v722, 98
      %v1022 = vpop.permute.xlu0 %1021
      %1023 = vrot.lane.b32.xlu0 %v723, 98
      %v1024 = vpop.permute.xlu0 %1023
      %vm1025 = vcmp.lt.s32.totalorder %v454, 98
      %v1026 = vsel %vm1025, %v1022, %v1024
      %v1027 = vsel %vm1025, %v1024, %v1022
      %vm1028 = vcmp.lt.s32.totalorder %v361, 14
      %vm1029 = vmand %vm1028, %vm734
      %v1030 = vsel %vm1029, 1, 0
      %v1031 = vlaneseq
      %v1032 = vshrl.u32 %v1031, 7
      %v1033 = vsub.s32 0, %v1032
      %v1034 = vrot.slane %v1030, %v1033
      %v1035 = vlaneseq
      %v1036 = vshrl.u32 %v1035, 7
      %v1037 = vsub.s32 1, %v1036
      %v1038 = vrot.slane %v1030, %v1037
      %vm1039 = vcmp.eq.s32.totalorder %v1034, 1
      %vm1040 = vcmp.eq.s32.totalorder %v1038, 1
      %v1041 = vsel %vm1039, %v1026, 0.0
      %v1042 = vsel %vm1040, %v1027, 0.0
      %1043 = vrot.lane.b32.xlu0 %v722, 97
      %v1044 = vpop.permute.xlu0 %1043
      %1045 = vrot.lane.b32.xlu0 %v723, 97
      %v1046 = vpop.permute.xlu0 %1045
      %vm1047 = vcmp.lt.s32.totalorder %v454, 97
      %v1048 = vsel %vm1047, %v1044, %v1046
      %v1049 = vsel %vm1047, %v1046, %v1044
      %vm1050 = vmand %vm1028, %vm459
      %v1051 = vsel %vm1050, 1, 0
      %v1052 = vlaneseq
      %v1053 = vshrl.u32 %v1052, 7
      %v1054 = vsub.s32 0, %v1053
      %v1055 = vrot.slane %v1051, %v1054
      %v1056 = vlaneseq
      %v1057 = vshrl.u32 %v1056, 7
      %v1058 = vsub.s32 1, %v1057
      %v1059 = vrot.slane %v1051, %v1058
      %vm1060 = vcmp.eq.s32.totalorder %v1055, 1
      %vm1061 = vcmp.eq.s32.totalorder %v1059, 1
      %v1062 = vsel %vm1060, %v1048, 0.0
      %v1063 = vsel %vm1061, %v1049, 0.0
      %1064 = vrot.lane.b32.xlu0 %v722, 96
      %v1065 = vpop.permute.xlu0 %1064
      %1066 = vrot.lane.b32.xlu0 %v723, 96
      %v1067 = vpop.permute.xlu0 %1066
      %vm1068 = vcmp.lt.s32.totalorder %v454, 96
      %v1069 = vsel %vm1068, %v1065, %v1067
      %v1070 = vsel %vm1068, %v1067, %v1065
      %v1071 = vsel %vm1028, 1, 0
      %v1072 = vlaneseq
      %v1073 = vshrl.u32 %v1072, 7
      %v1074 = vsub.s32 0, %v1073
      %v1075 = vrot.slane %v1071, %v1074
      %v1076 = vlaneseq
      %v1077 = vshrl.u32 %v1076, 7
      %v1078 = vsub.s32 1, %v1077
      %v1079 = vrot.slane %v1071, %v1078
      %vm1080 = vcmp.eq.s32.totalorder %v1075, 1
      %vm1081 = vcmp.eq.s32.totalorder %v1079, 1
      %v1082 = vsel %vm1080, %v1069, 0.0
      %v1083 = vsel %vm1081, %v1070, 0.0
      %1084 = vrot.lane.b32.xlu0 %v722, 95
      %v1085 = vpop.permute.xlu0 %1084
      %1086 = vrot.lane.b32.xlu0 %v723, 95
      %v1087 = vpop.permute.xlu0 %1086
      %vm1088 = vcmp.lt.s32.totalorder %v454, 95
      %v1089 = vsel %vm1088, %v1085, %v1087
      %v1090 = vsel %vm1088, %v1087, %v1085
      %vm1091 = vmand %vm1028, %vm501
      %v1092 = vsel %vm1091, 1, 0
      %v1093 = vlaneseq
      %v1094 = vshrl.u32 %v1093, 7
      %v1095 = vsub.s32 0, %v1094
      %v1096 = vrot.slane %v1092, %v1095
      %v1097 = vlaneseq
      %v1098 = vshrl.u32 %v1097, 7
      %v1099 = vsub.s32 1, %v1098
      %v1100 = vrot.slane %v1092, %v1099
      %vm1101 = vcmp.eq.s32.totalorder %v1096, 1
      %vm1102 = vcmp.eq.s32.totalorder %v1100, 1
      %v1103 = vsel %vm1101, %v1089, 0.0
      %v1104 = vsel %vm1102, %v1090, 0.0
      %1105 = vrot.lane.b32.xlu0 %v722, 94
      %v1106 = vpop.permute.xlu0 %1105
      %1107 = vrot.lane.b32.xlu0 %v723, 94
      %v1108 = vpop.permute.xlu0 %1107
      %vm1109 = vcmp.lt.s32.totalorder %v454, 94
      %v1110 = vsel %vm1109, %v1106, %v1108
      %v1111 = vsel %vm1109, %v1108, %v1106
      %vm1112 = vmand %vm1028, %vm818
      %v1113 = vsel %vm1112, 1, 0
      %v1114 = vlaneseq
      %v1115 = vshrl.u32 %v1114, 7
      %v1116 = vsub.s32 0, %v1115
      %v1117 = vrot.slane %v1113, %v1116
      %v1118 = vlaneseq
      %v1119 = vshrl.u32 %v1118, 7
      %v1120 = vsub.s32 1, %v1119
      %v1121 = vrot.slane %v1113, %v1120
      %vm1122 = vcmp.eq.s32.totalorder %v1117, 1
      %vm1123 = vcmp.eq.s32.totalorder %v1121, 1
      %v1124 = vsel %vm1122, %v1110, 0.0
      %v1125 = vsel %vm1123, %v1111, 0.0
      %v1128 = vrot.slane %v768, 4
      %v1129 = vrot.slane %v769, 4
      %v1134 = vrot.slane %v809, 4
      %v1135 = vrot.slane %v810, 4
      %v1140 = vrot.slane %v852, 4
      %v1141 = vrot.slane %v853, 4
      %v1146 = vrot.slane %v868, 4
      %v1147 = vrot.slane %v869, 4
      %v1152 = vrot.slane %v897, 4
      %v1153 = vrot.slane %v898, 4
      %v1158 = vrot.slane %v925, 4
      %v1159 = vrot.slane %v926, 4
      %v1164 = vrot.slane %v933, 4
      %v1165 = vrot.slane %v934, 4
      %v1170 = vrot.slane %v974, 4
      %v1171 = vrot.slane %v975, 4
      %v1174 = vsel %vm643, %v747, %v1128
      %v1175 = vsel %vm643, %v748, %v1129
      %v1176 = vsel %vm643, %v788, %v1134
      %v1177 = vsel %vm643, %v789, %v1135
      %v1178 = vsel %vm643, %v831, %v1140
      %v1179 = vsel %vm643, %v832, %v1141
      %v1180 = vsel %vm643, %v860, %v1146
      %v1181 = vsel %vm643, %v861, %v1147
      %v1182 = vsel %vm643, %v876, %v1152
      %v1183 = vsel %vm643, %v877, %v1153
      %v1184 = vsel %vm643, %v917, %v1158
      %v1185 = vsel %vm643, %v918, %v1159
      %v1186 = vsel %vm643, %v722, %v1164
      %v1187 = vsel %vm643, %v723, %v1165
      %v1188 = vsel %vm643, %v953, %v1170
      %v1189 = vsel %vm643, %v954, %v1171
      %v1192 = vrot.slane %v990, 4
      %v1193 = vrot.slane %v991, 4
      %v1198 = vrot.slane %v1019, 4
      %v1199 = vrot.slane %v1020, 4
      %v1204 = vrot.slane %v1062, 4
      %v1205 = vrot.slane %v1063, 4
      %v1210 = vrot.slane %v1103, 4
      %v1211 = vrot.slane %v1104, 4
      %v1214 = vsel %vm643, %v982, %v1192
      %v1215 = vsel %vm643, %v983, %v1193
      %v1216 = vsel %vm643, %v998, %v1198
      %v1217 = vsel %vm643, %v999, %v1199
      %v1218 = vsel %vm643, %v1041, %v1204
      %v1219 = vsel %vm643, %v1042, %v1205
      %v1220 = vsel %vm643, %v1082, %v1210
      %v1221 = vsel %vm643, %v1083, %v1211
      %v1222 = vpack.c.bf16 %v1176, %v1174
      %v1223 = vpack.c.bf16 %v1177, %v1175
      %v1224 = vpack.c.bf16 %v1180, %v1178
      %v1225 = vpack.c.bf16 %v1181, %v1179
      %v1226 = vpack.c.bf16 %v1184, %v1182
      %v1227 = vpack.c.bf16 %v1185, %v1183
      %v1228 = vpack.c.bf16 %v1188, %v1186
      %v1229 = vpack.c.bf16 %v1189, %v1187
      %v1230 = vpack.c.bf16 %v1216, %v1214
      %v1231 = vpack.c.bf16 %v1217, %v1215
      %v1232 = vpack.c.bf16 %v1220, %v1218
      %v1233 = vpack.c.bf16 %v1221, %v1219
      %v1234 = vpack.c.bf16 %v1124, %v1124
      %v1235 = vpack.c.bf16 %v1125, %v1125
      %v1236 = vld [vmem:[%s6] sm:$0xf]
      %v1237 = vld [vmem:[%s7] sm:$0xff]
      %1239 = vset.pattern.permute.xlu0 0
      %1240 = vperm.xlu0 %1239, %v1237
      %v1241 = vpop.permute.xlu0 %1240
      %vm1243 = vcmask 818176
      %v1245 = vsel %vm1243, %v1236, 0
      %v1248 = vsel %vm393, %v1234, 0
      %v1251 = vsel %vm393, %v1235, 0
      %1253 = vmatprep.subr.bf16.mxu0 %v1223
      %1254 = vmatpush1.bf16.msra.mxu0 %v1222
      %1255 = vmatprep.subr.bf16.mxu0 %v1225
      %1256 = vmatpush1.bf16.msra.mxu0 %v1224
      %1257 = vmatprep.subr.bf16.mxu0 %v1227
      %1258 = vmatpush1.bf16.msra.mxu0 %v1226
      %1259 = vmatprep.subr.bf16.mxu0 %v1229
      %1260 = vmatpush1.bf16.msra.mxu0 %v1228
      %1261 = vmatprep.subr.bf16.mxu0 %v1231
      %1262 = vmatpush1.bf16.msra.mxu0 %v1230
      %1263 = vmatprep.subr.bf16.mxu0 %v1233
      %1264 = vmatpush1.bf16.msra.mxu0 %v1232
      %1265 = vmatprep.subr.bf16.mxu0 %v1251
      %1266 = vmatpush1.bf16.msra.mxu0 %v1248
      %1267 = vmatprep.subr.bf16.mxu0 0
      %1268 = vmatpush1.bf16.msra.mxu0 0
      %1269 = vmatprep.subr.bf16.mxu0 0
      %1270 = vmatpush1.bf16.msra.mxu0 0
      %1271 = vmatprep.subr.bf16.mxu0 0
      %1272 = vmatpush1.bf16.msra.mxu0 0
      %1273 = vmatprep.subr.bf16.mxu0 0
      %1274 = vmatpush1.bf16.msra.mxu0 0
      %1275 = vmatprep.subr.bf16.mxu0 0
      %1276 = vmatpush1.bf16.msra.mxu0 0
      %1277 = vmatprep.subr.bf16.mxu0 0
      %1278 = vmatpush1.bf16.msra.mxu0 0
      %1279 = vmatprep.subr.bf16.mxu0 0
      %1280 = vmatpush1.bf16.msra.mxu0 0
      %1281 = vmatprep.subr.bf16.mxu0 0
      %1282 = vmatpush1.bf16.msra.mxu0 0
      %1283 = vmatprep.subr.bf16.mxu0 0
      %1284 = vmatpush1.bf16.msra.mxu0 0
      %1285 = vmatprep.mubr.bf16.mxu0 0
      %1286 = vmatmul.mubr.bf16.gmra.mrb[0].mxu0 %v1245
      %v1287 = vpop.f32.mrb[0].mxu0
      %v1288 = vadd.f32 %v1241, %v1287
      %v1289 = vpop.f32.mrb[0].mxu0
      %v1290 = vadd.f32 %v1241, %v1289
      %v1291 = vpop.f32.mrb[0].mxu0
      %v1292 = vpop.f32.mrb[0].mxu0
      %1293 = vdwg.mxu0
      %v1294 = vmax.f32 %v1288, 0.0
      %v1295 = vmax.f32 %v1290, 0.0
      %1296 = vst [vmem:[%s359 + $0x20] sm:$0xff] %v1294
      %1297 = vst [vmem:[%s359 + $0x28] sm:$0xff] %v1295
      %1298 = vrot.lane.b32.xlu0 %v364, 17
      %v1299 = vpop.permute.xlu0 %1298
      %1300 = vrot.lane.b32.xlu0 %v366, 17
      %v1301 = vpop.permute.xlu0 %1300
      %v1302 = vsel %vm455, %v1299, %v1301
      %v1303 = vsel %vm455, %v1301, %v1299
      %v1304 = vsel %vm470, %v1303, -inf
      %v1305 = vsel %vm471, %v1302, -inf
      %1306 = vrot.lane.b32.xlu0 %v364, 16
      %v1307 = vpop.permute.xlu0 %1306
      %1308 = vrot.lane.b32.xlu0 %v366, 16
      %v1309 = vpop.permute.xlu0 %1308
      %v1310 = vsel %vm478, %v1307, %v1309
      %v1311 = vsel %vm478, %v1309, %v1307
      %v1312 = vsel %vm490, %v1311, -inf
      %v1313 = vsel %vm491, %v1310, -inf
      %1314 = vrot.lane.b32.xlu0 %v364, 15
      %v1315 = vpop.permute.xlu0 %1314
      %1316 = vrot.lane.b32.xlu0 %v366, 15
      %v1317 = vpop.permute.xlu0 %1316
      %v1318 = vsel %vm498, %v1315, %v1317
      %v1319 = vsel %vm498, %v1317, %v1315
      %v1320 = vsel %vm512, %v1319, -inf
      %v1321 = vsel %vm513, %v1318, -inf
      %1322 = vrot.lane.b32.xlu0 %v364, 1
      %v1323 = vpop.permute.xlu0 %1322
      %1324 = vrot.lane.b32.xlu0 %v366, 1
      %v1325 = vpop.permute.xlu0 %1324
      %v1326 = vsel %vm520, %v1323, %v1325
      %v1327 = vsel %vm520, %v1325, %v1323
      %v1328 = vsel %vm532, %v1327, -inf
      %v1329 = vsel %vm533, %v1326, -inf
      %1330 = vrot.lane.b32.xlu0 %v364, 127
      %v1331 = vpop.permute.xlu0 %1330
      %1332 = vrot.lane.b32.xlu0 %v366, 127
      %v1333 = vpop.permute.xlu0 %1332
      %v1334 = vsel %vm540, %v1331, %v1333
      %v1335 = vsel %vm540, %v1333, %v1331
      %v1336 = vsel %vm552, %v1334, -inf
      %v1337 = vsel %vm553, %v1335, -inf
      %1338 = vrot.lane.b32.xlu0 %v364, 113
      %v1339 = vpop.permute.xlu0 %1338
      %1340 = vrot.lane.b32.xlu0 %v366, 113
      %v1341 = vpop.permute.xlu0 %1340
      %v1342 = vsel %vm560, %v1339, %v1341
      %v1343 = vsel %vm560, %v1341, %v1339
      %v1344 = vsel %vm574, %v1342, -inf
      %v1345 = vsel %vm575, %v1343, -inf
      %1346 = vrot.lane.b32.xlu0 %v364, 112
      %v1347 = vpop.permute.xlu0 %1346
      %1348 = vrot.lane.b32.xlu0 %v366, 112
      %v1349 = vpop.permute.xlu0 %1348
      %v1350 = vsel %vm582, %v1347, %v1349
      %v1351 = vsel %vm582, %v1349, %v1347
      %v1352 = vsel %vm594, %v1350, -inf
      %v1353 = vsel %vm595, %v1351, -inf
      %1354 = vrot.lane.b32.xlu0 %v364, 111
      %v1355 = vpop.permute.xlu0 %1354
      %1356 = vrot.lane.b32.xlu0 %v366, 111
      %v1357 = vpop.permute.xlu0 %1356
      %v1358 = vsel %vm602, %v1355, %v1357
      %v1359 = vsel %vm602, %v1357, %v1355
      %v1360 = vsel %vm615, %v1358, -inf
      %v1361 = vsel %vm616, %v1359, -inf
      %v1362 = vmax.f32 %v1304, %v1312
      %v1363 = vmax.f32 %v1305, %v1313
      %v1364 = vmax.f32 %v1362, %v1320
      %v1365 = vmax.f32 %v1363, %v1321
      %v1366 = vmax.f32 %v1364, %v1328
      %v1367 = vmax.f32 %v1365, %v1329
      %v1368 = vmax.f32 %v1366, %v364
      %v1369 = vmax.f32 %v1367, %v366
      %v1370 = vmax.f32 %v1368, %v1336
      %v1371 = vmax.f32 %v1369, %v1337
      %v1372 = vmax.f32 %v1370, %v1344
      %v1373 = vmax.f32 %v1371, %v1345
      %v1374 = vmax.f32 %v1372, %v1352
      %v1375 = vmax.f32 %v1373, %v1353
      %v1376 = vmax.f32 %v1374, %v1360
      %v1377 = vmax.f32 %v1375, %v1361
      %v1378 = vld [vmem:[%s8] sm:$0xf]
      %v1379 = vpack.c.bf16 %v1376, %v1376
      %v1380 = vpack.c.bf16 %v1377, %v1377
      %v1381 = vld [vmem:[%s9] sm:$0xff]
      %1383 = vset.pattern.permute.xlu0 0
      %1384 = vperm.xlu0 %1383, %v1381
      %v1385 = vpop.permute.xlu0 %1384
      %v1388 = vsel %vm389, %v1378, 0
      %v1391 = vsel %vm393, %v1379, 0
      %v1394 = vsel %vm393, %v1380, 0
      %1396 = vmatprep.subr.bf16.mxu0 %v1394
      %1397 = vmatpush1.bf16.msra.mxu0 %v1391
      %1398 = vmatprep.subr.bf16.mxu0 0
      %1399 = vmatpush1.bf16.msra.mxu0 0
      %1400 = vmatprep.subr.bf16.mxu0 0
      %1401 = vmatpush1.bf16.msra.mxu0 0
      %1402 = vmatprep.subr.bf16.mxu0 0
      %1403 = vmatpush1.bf16.msra.mxu0 0
      %1404 = vmatprep.subr.bf16.mxu0 0
      %1405 = vmatpush1.bf16.msra.mxu0 0
      %1406 = vmatprep.subr.bf16.mxu0 0
      %1407 = vmatpush1.bf16.msra.mxu0 0
      %1408 = vmatprep.subr.bf16.mxu0 0
      %1409 = vmatpush1.bf16.msra.mxu0 0
      %1410 = vmatprep.subr.bf16.mxu0 0
      %1411 = vmatpush1.bf16.msra.mxu0 0
      %1412 = vmatprep.subr.bf16.mxu0 0
      %1413 = vmatpush1.bf16.msra.mxu0 0
      %1414 = vmatprep.subr.bf16.mxu0 0
      %1415 = vmatpush1.bf16.msra.mxu0 0
      %1416 = vmatprep.subr.bf16.mxu0 0
      %1417 = vmatpush1.bf16.msra.mxu0 0
      %1418 = vmatprep.subr.bf16.mxu0 0
      %1419 = vmatpush1.bf16.msra.mxu0 0
      %1420 = vmatprep.subr.bf16.mxu0 0
      %1421 = vmatpush1.bf16.msra.mxu0 0
      %1422 = vmatprep.subr.bf16.mxu0 0
      %1423 = vmatpush1.bf16.msra.mxu0 0
      %1424 = vmatprep.subr.bf16.mxu0 0
      %1425 = vmatpush1.bf16.msra.mxu0 0
      %1426 = vmatprep.subr.bf16.mxu0 0
      %1427 = vmatpush1.bf16.msra.mxu0 0
      %1428 = vmatprep.mubr.bf16.mxu0 0
      %1429 = vmatmul.mubr.bf16.gmra.mrb[0].mxu0 %v1388
      %v1430 = vpop.f32.mrb[0].mxu0
      %v1431 = vadd.f32 %v1385, %v1430
      %v1432 = vpop.f32.mrb[0].mxu0
      %v1433 = vadd.f32 %v1385, %v1432
      %v1434 = vpop.f32.mrb[0].mxu0
      %v1435 = vpop.f32.mrb[0].mxu0
      %1436 = vdwg.mxu0
      %v1437 = vmax.f32 %v1431, 0.0
      %v1438 = vmax.f32 %v1433, 0.0
      %1439 = vst [vmem:[%s359 + $0x30] sm:$0xff] %v1437
      %1440 = vst [vmem:[%s359 + $0x38] sm:$0xff] %v1438
      %p1441 = scmp.lt.s32.totalorder %s21, 1
      %s1442 = scalar_select %p1441, %s21, 1
      %s1443 = smul.addr %s1442, 8
      %s1444 = smul.addr %s1443, 8
      %s1445 = scalar_lea.vmem %s10, %s1444
      // Predicated region
      $region61: #{inceptionv1_forward.1} parent=59 // pred_check
        %p1446 = pneg %p254
      $region62: #{inceptionv1_forward.1} parent=59 // pred_check_branch
        %1448 = sbr.rel (%p1446) target = $region64
      $region63: #{inceptionv1_forward.1} parent=59 // pred_region
        _
      $region64: #{inceptionv1_forward.1} parent=59 // pred_fallthru
        _
    $region60: #{inceptionv1_forward.1} parent=5 // pred_fallthru
      _
    %p1449 = scmp.le.s32.totalorder 2, %s16
    // Predicated region
    $region65: #{inceptionv1_forward.1} parent=5 // pred_check
      %p1450 = pneg %p1449
    $region66: #{inceptionv1_forward.1} parent=5 // pred_check_branch
      %1452 = sbr.rel (%p1450) target = $region68
    $region67: #{inceptionv1_forward.1} parent=5 // pred_region
      %s1453 = ssub.s32 %s16, 2
      // Predicated region
      $region69: #{inceptionv1_forward.1} parent=67 // pred_check
        %p1454 = pneg %p260
      $region70: #{inceptionv1_forward.1} parent=67 // pred_check_branch
        %1456 = sbr.rel (%p1454) target = $region72
      $region71: #{inceptionv1_forward.1} parent=67 // pred_region
        %p1457 = scmp.lt.s32.totalorder %s22, 1
        %s1458 = scalar_select %p1457, %s22, 1
        %s1459 = smul.addr %s1458, 8
        %s1460 = smul.addr %s1459, 8
        %s1461 = scalar_lea.vmem %s10, %s1460
      $region72: #{inceptionv1_forward.1} parent=67 // pred_fallthru
        _
    $region68: #{inceptionv1_forward.1} parent=5 // pred_fallthru
      _
  $region6: #{inceptionv1_forward.1} parent=0 // loop_footer
    %s20 = sadd.s32 1, %s16
  $region7: #{inceptionv1_forward.1} parent=0 // loop_footer_branch
    %15 = sbr.rel target = $region3
  $region8: #{inceptionv1_forward.1} parent=0 // loop_exit
    _

</llo_original>
